<compile_context>
chip_gen: v6e
topology: v6e:2x2x1
jax: 0.10.0
libtpu: 0.0.40
codegen_flags: <defaults>
</compile_context>

<pallas_src>
import jax
import jax.numpy as jnp
from jax.experimental import pallas as pl
from jax.experimental.pallas import tpu as pltpu

# ----------------------------- model sizes (small) -----------------------------
BATCH = 2
IN_CH = 3
SPATIAL = 16              # input H = W
KSIZE = 3
STRIDE = 2
C_STEM = 16               # stem conv output channels
NUM_FTRS = 32             # stands in for efficientnet-b0's 1280 feature channels
HIDDEN = 32               # stands in for lstm_hidden_size = 128
NUM_CLASSES = 2

HO = WO = SPATIAL // STRIDE
SEQ = HO * WO             # 64 "time" steps (spatial positions)
K_RAW = KSIZE * KSIZE * IN_CH   # 27
KP = 32                   # im2col contraction padded 27 -> 32 (sublane friendly)
BP = 8                    # batch padded 2 -> 8 = one full sublane tile
G4 = 4 * HIDDEN           # 128 = all four gates packed into one vreg width
M = SEQ * BP              # rows of the fused GEMM path; row index = t*BP + b (time-major)

CHUNK_T = 8               # time steps whose feature GEMMs are streamed together
CHUNK_ROWS = CHUNK_T * BP # 64 rows per chunk
NCHUNK = SEQ // CHUNK_T   # 8 chunks


# --------------------------- fused forward-pass kernel -------------------------
def _combined_fwd_kernel(patches_ref, w_stem_ref, b_stem_ref,
                         w_head_ref, b_head_ref,
                         w_ih_ref, w_hh_ref, b_lstm_ref,
                         w_fc_ref, b_fc_ref,
                         out_ref):
    # ---- hoisted weight loads / bias broadcasts / constant lane mask (once).
    w_stem = w_stem_ref[...]                               # (KP, C_STEM)
    w_head = w_head_ref[...]                               # (C_STEM, NUM_FTRS)
    w_ih = w_ih_ref[...]                                   # (NUM_FTRS, G4)
    w_hh = w_hh_ref[...]                                   # (G4, G4), rows >= HIDDEN zero
    b_stem = jnp.broadcast_to(b_stem_ref[...], (CHUNK_ROWS, C_STEM))
    b_head = jnp.broadcast_to(b_head_ref[...], (CHUNK_ROWS, NUM_FTRS))
    b_lstm = jnp.broadcast_to(b_lstm_ref[...], (CHUNK_ROWS, G4))

    lane = jax.lax.broadcasted_iota(jnp.int32, (BP, G4), 1)
    g_mask = (lane >= 2 * HIDDEN) & (lane < 3 * HIDDEN)    # lanes of the g gate

    def gx_chunk(kc):
        """Feature path + hoisted LSTM input projection for CHUNK_T time steps.

        "extract_features" stand-in: stem 3x3/s2 conv (as im2col GEMM) + swish,
        1x1 head projection + swish; permute/view/dropout(eval) are layout
        no-ops because rows are already (t, b) time-major.  Returns (64, G4).
        """
        start = kc * CHUNK_ROWS
        if not isinstance(start, int):
            start = pl.multiple_of(start, CHUNK_ROWS)
        p = patches_ref[pl.ds(start, CHUNK_ROWS), :]                       # (64, KP)
        z = jnp.dot(p, w_stem, preferred_element_type=jnp.float32) + b_stem
        f = z * jax.nn.sigmoid(z)                                          # swish
        z = jnp.dot(f, w_head, preferred_element_type=jnp.float32) + b_head
        f = z * jax.nn.sigmoid(z)                                          # (64, NUM_FTRS)
        return jnp.dot(f, w_ih, preferred_element_type=jnp.float32) + b_lstm

    def lstm_step(h, c, gx_t):
        # gx_t: (BP, G4) precomputed x_t @ W_ih + b;  gates packed [i | f | g | o].
        gates = gx_t + jnp.dot(h, w_hh, preferred_element_type=jnp.float32)
        pre = jnp.where(g_mask, jnp.tanh(gates), jax.nn.sigmoid(gates))
        # Re-align f/g/o onto lanes [0, HIDDEN) with XLU lane rotations
        # (pltpu.roll == jnp.roll: elements move to higher lane indices).
        i_g = pre                                   # i already on lanes [0, HIDDEN)
        f_g = pltpu.roll(pre, 3 * HIDDEN, axis=1)   # f: lanes [H,2H)  -> [0,H)
        g_g = pltpu.roll(pre, 2 * HIDDEN, axis=1)   # g: lanes [2H,3H) -> [0,H)
        o_g = pltpu.roll(pre, 1 * HIDDEN, axis=1)   # o: lanes [3H,4H) -> [0,H)
        # Lanes >= HIDDEN of h/c hold bounded junk; W_hh / W_fc rows >= HIDDEN
        # are zero, so the junk never reaches any real result.
        c_new = f_g * c + i_g * g_g
        h_new = o_g * jnp.tanh(c_new)
        return h_new, c_new

    def chunk_body(kc, carry):
        h, c, gx_cur = carry
        # Compute the NEXT chunk's feature GEMMs now; no data dependence on the
        # recurrence below, so the scheduler hides them in its latency slack.
        kn = jnp.minimum(kc + 1, NCHUNK - 1)       # last iter recomputes chunk 7; discarded
        gx_next = gx_chunk(kn)
        for t in range(CHUNK_T):                   # 8 unrolled serial steps
            h, c = lstm_step(h, c, gx_cur[t * BP:(t + 1) * BP, :])
        return h, c, gx_next

    h0 = jnp.zeros((BP, G4), jnp.float32)
    c0 = jnp.zeros((BP, G4), jnp.float32)
    gx0 = gx_chunk(0)
    h_last, _, _ = jax.lax.fori_loop(0, NCHUNK, chunk_body, (h0, c0, gx0))

    # dropout(out[:, -1, :]) is identity in eval mode; final FC -> only HBM store.
    out_ref[...] = (jnp.dot(h_last, w_fc_ref[...], preferred_element_type=jnp.float32)
                    + b_fc_ref[...])


def _whole_array_spec(shape):
    ndim = len(shape)

    def index_map(i):
        return (0,) * ndim

    return pl.BlockSpec(shape, index_map)


def _fused_forward_call(patches_tm, kp):
    args = (patches_tm, kp["w_stem"], kp["b_stem"], kp["w_head"], kp["b_head"],
            kp["w_ih"], kp["w_hh"], kp["b_lstm"], kp["w_fc"], kp["b_fc"])

    flops = (2 * M * KP * C_STEM + 2 * M * C_STEM * NUM_FTRS
             + 2 * M * NUM_FTRS * G4               # hoisted input projection
             + SEQ * 2 * BP * G4 * G4              # recurrent h @ W_hh
             + 2 * BP * G4 * NUM_CLASSES)
    transcendentals = M * (C_STEM + NUM_FTRS) + SEQ * 3 * BP * G4
    bytes_accessed = 4 * (sum(int(a.size) for a in args) + BP * NUM_CLASSES)

    return pl.pallas_call(
        _combined_fwd_kernel,
        out_shape=jax.ShapeDtypeStruct((BP, NUM_CLASSES), jnp.float32),
        grid=(1,),
        in_specs=[_whole_array_spec(a.shape) for a in args],
        out_specs=_whole_array_spec((BP, NUM_CLASSES)),
        compiler_params=pltpu.CompilerParams(
            dimension_semantics=("arbitrary",)),
        cost_estimate=pl.CostEstimate(flops=flops,
                                      transcendentals=transcendentals,
                                      bytes_accessed=bytes_accessed),
    )(*args)


# ------------------------------- plain-JAX glue --------------------------------
def _extract_patches(x_nhwc):
    """3x3, stride-2, pad-1 patch extraction -> (B, SEQ, 27); (ky,kx)-major, cin-minor."""
    # TODO(synk): at real EfficientNet sizes this im2col (or 9 shifted matmuls)
    # would move inside the kernel; at this toy size it is tiny XLA glue.
    b = x_nhwc.shape[0]
    xp = jnp.pad(x_nhwc, ((0, 0), (1, 1), (1, 1), (0, 0)))
    cols = []
    for ky in range(KSIZE):
        for kx in range(KSIZE):
            cols.append(xp[:, ky:ky + STRIDE * HO:STRIDE,
                           kx:kx + STRIDE * WO:STRIDE, :])        # (B, HO, WO, C)
    patches = jnp.stack(cols, axis=3)                             # (B, HO, WO, 9, C)
    return patches.reshape(b, SEQ, K_RAW)


@jax.jit
def combined_model_forward(x_nchw, kernel_params):
    b = x_nchw.shape[0]
    x = jnp.transpose(x_nchw, (0, 2, 3, 1)).astype(jnp.float32)   # NCHW -> NHWC
    patches = _extract_patches(x)                                 # (B, SEQ, 27)
    # Pad K 27->32 and batch 2->8 (one sublane tile), then lay out time-major so
    # the in-kernel chunk reads are contiguous aligned rows [t*BP, t*BP + BP).
    patches = jnp.pad(patches, ((0, BP - b), (0, 0), (0, KP - K_RAW)))
    patches_tm = jnp.transpose(patches, (1, 0, 2)).reshape(M, KP)
    out = _fused_forward_call(patches_tm, kernel_params)          # (BP, NUM_CLASSES)
    return out[:b]


# ----------------------------- parameters (synthetic) ---------------------------
def init_params(key):
    ks = jax.random.split(key, 8)
    s = 0.1
    # Stem conv as GEMM weight with (ky*kx*cin, cout) row order matching im2col.
    # TODO(synk): real pretrained Conv2d weights ((cout, cin, ky, kx)) would need
    # a permutation into this order before use.
    w_stem = s * jax.random.normal(ks[0], (K_RAW, C_STEM), jnp.float32)
    b_stem = s * jax.random.normal(ks[1], (1, C_STEM), jnp.float32)
    w_head = s * jax.random.normal(ks[2], (C_STEM, NUM_FTRS), jnp.float32)
    b_head = s * jax.random.normal(ks[3], (1, NUM_FTRS), jnp.float32)
    # LSTM (PyTorch gate order i, f, g, o; bias = b_ih + b_hh), stored transposed.
    w_ih = s * jax.random.normal(ks[4], (NUM_FTRS, 4, HIDDEN), jnp.float32)
    w_hh = s * jax.random.normal(ks[5], (HIDDEN, 4, HIDDEN), jnp.float32)
    b_lstm = s * jax.random.normal(ks[6], (4, HIDDEN), jnp.float32)
    w_fc = s * jax.random.normal(ks[7], (HIDDEN, NUM_CLASSES), jnp.float32)
    b_fc = jnp.zeros((1, NUM_CLASSES), jnp.float32)

    # Kernel-layout copies:
    #   * K padded 27 -> 32.
    #   * All four gates packed into one 128-lane block: W_ih (NUM_FTRS, 128),
    #     b_lstm (1, 128).
    #   * W_hh / W_fc padded along their *contraction* rows to 128 with zeros
    #     (rows >= HIDDEN are zero), so the junk lanes of h never leak.
    w_stem_p = jnp.pad(w_stem, ((0, KP - K_RAW), (0, 0)))
    w_ih_k = w_ih.reshape(NUM_FTRS, G4)
    w_hh_k = jnp.zeros((G4, G4), jnp.float32).at[:HIDDEN, :].set(
        w_hh.reshape(HIDDEN, G4))
    b_lstm_k = b_lstm.reshape(1, G4)
    w_fc_k = jnp.zeros((G4, NUM_CLASSES), jnp.float32).at[:HIDDEN, :].set(w_fc)

    kernel_params = {
        "w_stem": w_stem_p, "b_stem": b_stem,
        "w_head": w_head, "b_head": b_head,
        "w_ih": w_ih_k, "w_hh": w_hh_k, "b_lstm": b_lstm_k,
        "w_fc": w_fc_k, "b_fc": b_fc,
    }
    ref_params = {
        "w_stem": w_stem, "b_stem": b_stem, "w_head": w_head, "b_head": b_head,
        "w_ih": w_ih, "w_hh": w_hh, "b_lstm": b_lstm, "w_fc": w_fc, "b_fc": b_fc,
    }
    return kernel_params, ref_params


# --------------------------- pure-JAX reference (check) -------------------------
def _reference_forward(x_nchw, rp):
    x = jnp.transpose(x_nchw, (0, 2, 3, 1)).astype(jnp.float32)
    patches = _extract_patches(x)                                  # (B, SEQ, 27)
    z = patches @ rp["w_stem"] + rp["b_stem"]
    feat = z * jax.nn.sigmoid(z)
    z = feat @ rp["w_head"] + rp["b_head"]
    feat = z * jax.nn.sigmoid(z)                                   # (B, SEQ, F)

    w_ih = rp["w_ih"].reshape(NUM_FTRS, 4 * HIDDEN)
    w_hh = rp["w_hh"].reshape(HIDDEN, 4 * HIDDEN)
    bias = rp["b_lstm"].reshape(1, 4 * HIDDEN)

    def step(carry, x_t):
        h, c = carry
        gates = x_t @ w_ih + h @ w_hh + bias
        i = jax.nn.sigmoid(gates[:, 0 * HIDDEN:1 * HIDDEN])
        f = jax.nn.sigmoid(gates[:, 1 * HIDDEN:2 * HIDDEN])
        g = jnp.tanh(gates[:, 2 * HIDDEN:3 * HIDDEN])
        o = jax.nn.sigmoid(gates[:, 3 * HIDDEN:4 * HIDDEN])
        c = f * c + i * g
        h = o * jnp.tanh(c)
        return (h, c), None

    b = x.shape[0]
    h0 = jnp.zeros((b, HIDDEN), jnp.float32)
    c0 = jnp.zeros((b, HIDDEN), jnp.float32)
    (h_last, _), _ = jax.lax.scan(step, (h0, c0), jnp.transpose(feat, (1, 0, 2)))
    return h_last @ rp["w_fc"] + rp["b_fc"]


if __name__ == "__main__":
    key = jax.random.PRNGKey(0)
    k_x, k_p = jax.random.split(key)
    x = jax.random.normal(k_x, (BATCH, IN_CH, SPATIAL, SPATIAL), jnp.float32)
    kernel_params, ref_params = init_params(k_p)

    out = combined_model_forward(x, kernel_params)
    out = jax.block_until_ready(out)
    assert out.shape == (BATCH, NUM_CLASSES), out.shape
    assert bool(jnp.all(jnp.isfinite(out)))

    ref = jax.block_until_ready(jax.jit(_reference_forward)(x, ref_params))
    assert jnp.allclose(out, ref, rtol=1e-3, atol=1e-3), (out, ref)
    print("KERNEL_OK")
</pallas_src>

<mosaic_0001>
module attributes {stable_mosaic.version = 11 : i64} {
  func.func @_combined_fwd_kernel(%arg0: i32, %arg1: memref<512x32xf32, #tpu.memory_space<vmem>>, %arg2: memref<32x16xf32, #tpu.memory_space<vmem>>, %arg3: memref<1x16xf32, #tpu.memory_space<vmem>>, %arg4: memref<16x32xf32, #tpu.memory_space<vmem>>, %arg5: memref<1x32xf32, #tpu.memory_space<vmem>>, %arg6: memref<32x128xf32, #tpu.memory_space<vmem>>, %arg7: memref<128x128xf32, #tpu.memory_space<vmem>>, %arg8: memref<1x128xf32, #tpu.memory_space<vmem>>, %arg9: memref<128x2xf32, #tpu.memory_space<vmem>>, %arg10: memref<1x2xf32, #tpu.memory_space<vmem>>, %arg11: memref<8x2xf32, #tpu.memory_space<vmem>>) attributes {dimension_semantics = [#tpu.dimension_semantics<arbitrary>], iteration_bounds = array<i64: 1>, scalar_prefetch = 0 : i64, scratch_operands = 0 : i64, tpu.core_type = #tpu.core_type<tc>, window_params = [{pipeline_mode = #tpu.pipeline_mode<synchronous>, transform_indices = @transform_0, window_bounds = array<i64: 512, 32>}, {pipeline_mode = #tpu.pipeline_mode<synchronous>, transform_indices = @transform_1, window_bounds = array<i64: 32, 16>}, {pipeline_mode = #tpu.pipeline_mode<synchronous>, transform_indices = @transform_2, window_bounds = array<i64: 1, 16>}, {pipeline_mode = #tpu.pipeline_mode<synchronous>, transform_indices = @transform_3, window_bounds = array<i64: 16, 32>}, {pipeline_mode = #tpu.pipeline_mode<synchronous>, transform_indices = @transform_4, window_bounds = array<i64: 1, 32>}, {pipeline_mode = #tpu.pipeline_mode<synchronous>, transform_indices = @transform_5, window_bounds = array<i64: 32, 128>}, {pipeline_mode = #tpu.pipeline_mode<synchronous>, transform_indices = @transform_6, window_bounds = array<i64: 128, 128>}, {pipeline_mode = #tpu.pipeline_mode<synchronous>, transform_indices = @transform_7, window_bounds = array<i64: 1, 128>}, {pipeline_mode = #tpu.pipeline_mode<synchronous>, transform_indices = @transform_8, window_bounds = array<i64: 128, 2>}, {pipeline_mode = #tpu.pipeline_mode<synchronous>, transform_indices = @transform_9, window_bounds = array<i64: 1, 2>}, {pipeline_mode = #tpu.pipeline_mode<synchronous>, transform_indices = @transform_10, window_bounds = array<i64: 8, 2>}]} {
    %c0 = arith.constant 0 : index
    %c0_0 = arith.constant 0 : index
    %0 = vector.load %arg2[%c0, %c0_0] : memref<32x16xf32, #tpu.memory_space<vmem>>, vector<32x16xf32>
    %c0_1 = arith.constant 0 : index
    %c0_2 = arith.constant 0 : index
    %1 = vector.load %arg4[%c0_1, %c0_2] : memref<16x32xf32, #tpu.memory_space<vmem>>, vector<16x32xf32>
    %c0_3 = arith.constant 0 : index
    %c0_4 = arith.constant 0 : index
    %2 = vector.load %arg6[%c0_3, %c0_4] : memref<32x128xf32, #tpu.memory_space<vmem>>, vector<32x128xf32>
    %c0_5 = arith.constant 0 : index
    %c0_6 = arith.constant 0 : index
    %3 = vector.load %arg7[%c0_5, %c0_6] : memref<128x128xf32, #tpu.memory_space<vmem>>, vector<128x128xf32>
    %c0_7 = arith.constant 0 : index
    %c0_8 = arith.constant 0 : index
    %4 = vector.load %arg3[%c0_7, %c0_8] : memref<1x16xf32, #tpu.memory_space<vmem>>, vector<1x16xf32>
    %5 = vector.shape_cast %4 : vector<1x16xf32> to vector<1x16xf32>
    %6 = vector.broadcast %5 : vector<1x16xf32> to vector<64x16xf32>
    %c0_9 = arith.constant 0 : index
    %c0_10 = arith.constant 0 : index
    %7 = vector.load %arg5[%c0_9, %c0_10] : memref<1x32xf32, #tpu.memory_space<vmem>>, vector<1x32xf32>
    %8 = vector.shape_cast %7 : vector<1x32xf32> to vector<1x32xf32>
    %9 = vector.broadcast %8 : vector<1x32xf32> to vector<64x32xf32>
    %c0_11 = arith.constant 0 : index
    %c0_12 = arith.constant 0 : index
    %10 = vector.load %arg8[%c0_11, %c0_12] : memref<1x128xf32, #tpu.memory_space<vmem>>, vector<1x128xf32>
    %11 = vector.shape_cast %10 : vector<1x128xf32> to vector<1x128xf32>
    %12 = vector.broadcast %11 : vector<1x128xf32> to vector<64x128xf32>
    %13 = tpu.iota {dimensions = array<i32: 1>} : vector<8x128xi32>
    %c64_i32 = arith.constant 64 : i32
    %14 = vector.broadcast %c64_i32 : i32 to vector<8x128xi32>
    %15 = arith.cmpi sge, %13, %14 : vector<8x128xi32>
    %c96_i32 = arith.constant 96 : i32
    %16 = vector.broadcast %c96_i32 : i32 to vector<8x128xi32>
    %17 = arith.cmpi slt, %13, %16 : vector<8x128xi32>
    %18 = arith.andi %15, %17 : vector<8x128xi1>
    %cst = arith.constant 0.000000e+00 : f32
    %19 = vector.broadcast %cst : f32 to vector<8x128xf32>
    %cst_13 = arith.constant 0.000000e+00 : f32
    %20 = vector.broadcast %cst_13 : f32 to vector<8x128xf32>
    %c0_14 = arith.constant 0 : index
    %c0_15 = arith.constant 0 : index
    %21 = vector.load %arg1[%c0_14, %c0_15] : memref<512x32xf32, #tpu.memory_space<vmem>>, vector<64x32xf32>
    %cst_16 = arith.constant dense<0.000000e+00> : vector<64x16xf32>
    %22 = tpu.matmul %21, %0, %cst_16 {dimension_numbers = #tpu.dot_dimension_numbers<[1], [0], [0], [1], [0, 0, 1, 1], [], []>} : vector<64x32xf32>, vector<32x16xf32>, vector<64x16xf32> -> vector<64x16xf32>
    %23 = arith.addf %22, %6 : vector<64x16xf32>
    %24 = arith.negf %23 : vector<64x16xf32>
    %25 = math.exp %24 : vector<64x16xf32>
    %cst_17 = arith.constant 1.000000e+00 : f32
    %26 = vector.broadcast %cst_17 : f32 to vector<64x16xf32>
    %27 = arith.addf %26, %25 : vector<64x16xf32>
    %28 = arith.divf %26, %27 : vector<64x16xf32>
    %29 = arith.mulf %23, %28 : vector<64x16xf32>
    %cst_18 = arith.constant dense<0.000000e+00> : vector<64x32xf32>
    %30 = tpu.matmul %29, %1, %cst_18 {dimension_numbers = #tpu.dot_dimension_numbers<[1], [0], [0], [1], [0, 0, 1, 1], [], []>} : vector<64x16xf32>, vector<16x32xf32>, vector<64x32xf32> -> vector<64x32xf32>
    %31 = arith.addf %30, %9 : vector<64x32xf32>
    %32 = arith.negf %31 : vector<64x32xf32>
    %33 = math.exp %32 : vector<64x32xf32>
    %cst_19 = arith.constant 1.000000e+00 : f32
    %34 = vector.broadcast %cst_19 : f32 to vector<64x32xf32>
    %35 = arith.addf %34, %33 : vector<64x32xf32>
    %36 = arith.divf %34, %35 : vector<64x32xf32>
    %37 = arith.mulf %31, %36 : vector<64x32xf32>
    %cst_20 = arith.constant dense<0.000000e+00> : vector<64x128xf32>
    %38 = tpu.matmul %37, %2, %cst_20 {dimension_numbers = #tpu.dot_dimension_numbers<[1], [0], [0], [1], [0, 0, 1, 1], [], []>} : vector<64x32xf32>, vector<32x128xf32>, vector<64x128xf32> -> vector<64x128xf32>
    %39 = arith.addf %38, %12 : vector<64x128xf32>
    %c0_i32 = arith.constant 0 : i32
    %c8_i32 = arith.constant 8 : i32
    %40 = arith.addi %c0_i32, %c8_i32 : i32
    %c1_i32 = arith.constant 1 : i32
    %41:3 = scf.for %arg12 = %c0_i32 to %40 step %c1_i32 iter_args(%arg13 = %19, %arg14 = %20, %arg15 = %39) -> (vector<8x128xf32>, vector<8x128xf32>, vector<64x128xf32>)  : i32 {
      %c1_i32_29 = arith.constant 1 : i32
      %48 = arith.addi %arg12, %c1_i32_29 : i32
      %c7_i32 = arith.constant 7 : i32
      %49 = arith.minsi %48, %c7_i32 : i32
      %c64_i32_30 = arith.constant 64 : i32
      %50 = arith.muli %49, %c64_i32_30 : i32
      %51 = tpu.assume_multiple %50, 64 : i32
      %52 = arith.index_cast %51 : i32 to index
      %c0_31 = arith.constant 0 : index
      %53 = vector.load %arg1[%52, %c0_31] : memref<512x32xf32, #tpu.memory_space<vmem>>, vector<64x32xf32>
      %cst_32 = arith.constant dense<0.000000e+00> : vector<64x16xf32>
      %54 = tpu.matmul %53, %0, %cst_32 {dimension_numbers = #tpu.dot_dimension_numbers<[1], [0], [0], [1], [0, 0, 1, 1], [], []>} : vector<64x32xf32>, vector<32x16xf32>, vector<64x16xf32> -> vector<64x16xf32>
      %55 = arith.addf %54, %6 : vector<64x16xf32>
      %56 = arith.negf %55 : vector<64x16xf32>
      %57 = math.exp %56 : vector<64x16xf32>
      %cst_33 = arith.constant 1.000000e+00 : f32
      %58 = vector.broadcast %cst_33 : f32 to vector<64x16xf32>
      %59 = arith.addf %58, %57 : vector<64x16xf32>
      %60 = arith.divf %58, %59 : vector<64x16xf32>
      %61 = arith.mulf %55, %60 : vector<64x16xf32>
      %cst_34 = arith.constant dense<0.000000e+00> : vector<64x32xf32>
      %62 = tpu.matmul %61, %1, %cst_34 {dimension_numbers = #tpu.dot_dimension_numbers<[1], [0], [0], [1], [0, 0, 1, 1], [], []>} : vector<64x16xf32>, vector<16x32xf32>, vector<64x32xf32> -> vector<64x32xf32>
      %63 = arith.addf %62, %9 : vector<64x32xf32>
      %64 = arith.negf %63 : vector<64x32xf32>
      %65 = math.exp %64 : vector<64x32xf32>
      %cst_35 = arith.constant 1.000000e+00 : f32
      %66 = vector.broadcast %cst_35 : f32 to vector<64x32xf32>
      %67 = arith.addf %66, %65 : vector<64x32xf32>
      %68 = arith.divf %66, %67 : vector<64x32xf32>
      %69 = arith.mulf %63, %68 : vector<64x32xf32>
      %cst_36 = arith.constant dense<0.000000e+00> : vector<64x128xf32>
      %70 = tpu.matmul %69, %2, %cst_36 {dimension_numbers = #tpu.dot_dimension_numbers<[1], [0], [0], [1], [0, 0, 1, 1], [], []>} : vector<64x32xf32>, vector<32x128xf32>, vector<64x128xf32> -> vector<64x128xf32>
      %71 = arith.addf %70, %12 : vector<64x128xf32>
      %72 = vector.extract_strided_slice %arg15 {offsets = [0, 0], sizes = [8, 128], strides = [1, 1]} : vector<64x128xf32> to vector<8x128xf32>
      %cst_37 = arith.constant dense<0.000000e+00> : vector<8x128xf32>
      %73 = tpu.matmul %arg13, %3, %cst_37 {dimension_numbers = #tpu.dot_dimension_numbers<[1], [0], [0], [1], [0, 0, 1, 1], [], []>} : vector<8x128xf32>, vector<128x128xf32>, vector<8x128xf32> -> vector<8x128xf32>
      %74 = arith.addf %72, %73 : vector<8x128xf32>
      %75 = math.tanh %74 : vector<8x128xf32>
      %76 = arith.negf %74 : vector<8x128xf32>
      %77 = math.exp %76 : vector<8x128xf32>
      %cst_38 = arith.constant 1.000000e+00 : f32
      %78 = vector.broadcast %cst_38 : f32 to vector<8x128xf32>
      %79 = arith.addf %78, %77 : vector<8x128xf32>
      %80 = arith.divf %78, %79 : vector<8x128xf32>
      %81 = arith.select %18, %75, %80 : vector<8x128xi1>, vector<8x128xf32>
      %c96_i32_39 = arith.constant 96 : i32
      %82 = tpu.dynamic_rotate %81 by %c96_i32_39 dim 1 : vector<8x128xf32>, i32 -> vector<8x128xf32>
      %c64_i32_40 = arith.constant 64 : i32
      %83 = tpu.dynamic_rotate %81 by %c64_i32_40 dim 1 : vector<8x128xf32>, i32 -> vector<8x128xf32>
      %c32_i32 = arith.constant 32 : i32
      %84 = tpu.dynamic_rotate %81 by %c32_i32 dim 1 : vector<8x128xf32>, i32 -> vector<8x128xf32>
      %85 = arith.mulf %82, %arg14 : vector<8x128xf32>
      %86 = arith.mulf %81, %83 : vector<8x128xf32>
      %87 = arith.addf %85, %86 : vector<8x128xf32>
      %88 = math.tanh %87 : vector<8x128xf32>
      %89 = arith.mulf %84, %88 : vector<8x128xf32>
      %90 = vector.extract_strided_slice %arg15 {offsets = [8, 0], sizes = [8, 128], strides = [1, 1]} : vector<64x128xf32> to vector<8x128xf32>
      %cst_41 = arith.constant dense<0.000000e+00> : vector<8x128xf32>
      %91 = tpu.matmul %89, %3, %cst_41 {dimension_numbers = #tpu.dot_dimension_numbers<[1], [0], [0], [1], [0, 0, 1, 1], [], []>} : vector<8x128xf32>, vector<128x128xf32>, vector<8x128xf32> -> vector<8x128xf32>
      %92 = arith.addf %90, %91 : vector<8x128xf32>
      %93 = math.tanh %92 : vector<8x128xf32>
      %94 = arith.negf %92 : vector<8x128xf32>
      %95 = math.exp %94 : vector<8x128xf32>
      %cst_42 = arith.constant 1.000000e+00 : f32
      %96 = vector.broadcast %cst_42 : f32 to vector<8x128xf32>
      %97 = arith.addf %96, %95 : vector<8x128xf32>
      %98 = arith.divf %96, %97 : vector<8x128xf32>
      %99 = arith.select %18, %93, %98 : vector<8x128xi1>, vector<8x128xf32>
      %c96_i32_43 = arith.constant 96 : i32
      %100 = tpu.dynamic_rotate %99 by %c96_i32_43 dim 1 : vector<8x128xf32>, i32 -> vector<8x128xf32>
      %c64_i32_44 = arith.constant 64 : i32
      %101 = tpu.dynamic_rotate %99 by %c64_i32_44 dim 1 : vector<8x128xf32>, i32 -> vector<8x128xf32>
      %c32_i32_45 = arith.constant 32 : i32
      %102 = tpu.dynamic_rotate %99 by %c32_i32_45 dim 1 : vector<8x128xf32>, i32 -> vector<8x128xf32>
      %103 = arith.mulf %100, %87 : vector<8x128xf32>
      %104 = arith.mulf %99, %101 : vector<8x128xf32>
      %105 = arith.addf %103, %104 : vector<8x128xf32>
      %106 = math.tanh %105 : vector<8x128xf32>
      %107 = arith.mulf %102, %106 : vector<8x128xf32>
      %108 = vector.extract_strided_slice %arg15 {offsets = [16, 0], sizes = [8, 128], strides = [1, 1]} : vector<64x128xf32> to vector<8x128xf32>
      %cst_46 = arith.constant dense<0.000000e+00> : vector<8x128xf32>
      %109 = tpu.matmul %107, %3, %cst_46 {dimension_numbers = #tpu.dot_dimension_numbers<[1], [0], [0], [1], [0, 0, 1, 1], [], []>} : vector<8x128xf32>, vector<128x128xf32>, vector<8x128xf32> -> vector<8x128xf32>
      %110 = arith.addf %108, %109 : vector<8x128xf32>
      %111 = math.tanh %110 : vector<8x128xf32>
      %112 = arith.negf %110 : vector<8x128xf32>
      %113 = math.exp %112 : vector<8x128xf32>
      %cst_47 = arith.constant 1.000000e+00 : f32
      %114 = vector.broadcast %cst_47 : f32 to vector<8x128xf32>
      %115 = arith.addf %114, %113 : vector<8x128xf32>
      %116 = arith.divf %114, %115 : vector<8x128xf32>
      %117 = arith.select %18, %111, %116 : vector<8x128xi1>, vector<8x128xf32>
      %c96_i32_48 = arith.constant 96 : i32
      %118 = tpu.dynamic_rotate %117 by %c96_i32_48 dim 1 : vector<8x128xf32>, i32 -> vector<8x128xf32>
      %c64_i32_49 = arith.constant 64 : i32
      %119 = tpu.dynamic_rotate %117 by %c64_i32_49 dim 1 : vector<8x128xf32>, i32 -> vector<8x128xf32>
      %c32_i32_50 = arith.constant 32 : i32
      %120 = tpu.dynamic_rotate %117 by %c32_i32_50 dim 1 : vector<8x128xf32>, i32 -> vector<8x128xf32>
      %121 = arith.mulf %118, %105 : vector<8x128xf32>
      %122 = arith.mulf %117, %119 : vector<8x128xf32>
      %123 = arith.addf %121, %122 : vector<8x128xf32>
      %124 = math.tanh %123 : vector<8x128xf32>
      %125 = arith.mulf %120, %124 : vector<8x128xf32>
      %126 = vector.extract_strided_slice %arg15 {offsets = [24, 0], sizes = [8, 128], strides = [1, 1]} : vector<64x128xf32> to vector<8x128xf32>
      %cst_51 = arith.constant dense<0.000000e+00> : vector<8x128xf32>
      %127 = tpu.matmul %125, %3, %cst_51 {dimension_numbers = #tpu.dot_dimension_numbers<[1], [0], [0], [1], [0, 0, 1, 1], [], []>} : vector<8x128xf32>, vector<128x128xf32>, vector<8x128xf32> -> vector<8x128xf32>
      %128 = arith.addf %126, %127 : vector<8x128xf32>
      %129 = math.tanh %128 : vector<8x128xf32>
      %130 = arith.negf %128 : vector<8x128xf32>
      %131 = math.exp %130 : vector<8x128xf32>
      %cst_52 = arith.constant 1.000000e+00 : f32
      %132 = vector.broadcast %cst_52 : f32 to vector<8x128xf32>
      %133 = arith.addf %132, %131 : vector<8x128xf32>
      %134 = arith.divf %132, %133 : vector<8x128xf32>
      %135 = arith.select %18, %129, %134 : vector<8x128xi1>, vector<8x128xf32>
      %c96_i32_53 = arith.constant 96 : i32
      %136 = tpu.dynamic_rotate %135 by %c96_i32_53 dim 1 : vector<8x128xf32>, i32 -> vector<8x128xf32>
      %c64_i32_54 = arith.constant 64 : i32
      %137 = tpu.dynamic_rotate %135 by %c64_i32_54 dim 1 : vector<8x128xf32>, i32 -> vector<8x128xf32>
      %c32_i32_55 = arith.constant 32 : i32
      %138 = tpu.dynamic_rotate %135 by %c32_i32_55 dim 1 : vector<8x128xf32>, i32 -> vector<8x128xf32>
      %139 = arith.mulf %136, %123 : vector<8x128xf32>
      %140 = arith.mulf %135, %137 : vector<8x128xf32>
      %141 = arith.addf %139, %140 : vector<8x128xf32>
      %142 = math.tanh %141 : vector<8x128xf32>
      %143 = arith.mulf %138, %142 : vector<8x128xf32>
      %144 = vector.extract_strided_slice %arg15 {offsets = [32, 0], sizes = [8, 128], strides = [1, 1]} : vector<64x128xf32> to vector<8x128xf32>
      %cst_56 = arith.constant dense<0.000000e+00> : vector<8x128xf32>
      %145 = tpu.matmul %143, %3, %cst_56 {dimension_numbers = #tpu.dot_dimension_numbers<[1], [0], [0], [1], [0, 0, 1, 1], [], []>} : vector<8x128xf32>, vector<128x128xf32>, vector<8x128xf32> -> vector<8x128xf32>
      %146 = arith.addf %144, %145 : vector<8x128xf32>
      %147 = math.tanh %146 : vector<8x128xf32>
      %148 = arith.negf %146 : vector<8x128xf32>
      %149 = math.exp %148 : vector<8x128xf32>
      %cst_57 = arith.constant 1.000000e+00 : f32
      %150 = vector.broadcast %cst_57 : f32 to vector<8x128xf32>
      %151 = arith.addf %150, %149 : vector<8x128xf32>
      %152 = arith.divf %150, %151 : vector<8x128xf32>
      %153 = arith.select %18, %147, %152 : vector<8x128xi1>, vector<8x128xf32>
      %c96_i32_58 = arith.constant 96 : i32
      %154 = tpu.dynamic_rotate %153 by %c96_i32_58 dim 1 : vector<8x128xf32>, i32 -> vector<8x128xf32>
      %c64_i32_59 = arith.constant 64 : i32
      %155 = tpu.dynamic_rotate %153 by %c64_i32_59 dim 1 : vector<8x128xf32>, i32 -> vector<8x128xf32>
      %c32_i32_60 = arith.constant 32 : i32
      %156 = tpu.dynamic_rotate %153 by %c32_i32_60 dim 1 : vector<8x128xf32>, i32 -> vector<8x128xf32>
      %157 = arith.mulf %154, %141 : vector<8x128xf32>
      %158 = arith.mulf %153, %155 : vector<8x128xf32>
      %159 = arith.addf %157, %158 : vector<8x128xf32>
      %160 = math.tanh %159 : vector<8x128xf32>
      %161 = arith.mulf %156, %160 : vector<8x128xf32>
      %162 = vector.extract_strided_slice %arg15 {offsets = [40, 0], sizes = [8, 128], strides = [1, 1]} : vector<64x128xf32> to vector<8x128xf32>
      %cst_61 = arith.constant dense<0.000000e+00> : vector<8x128xf32>
      %163 = tpu.matmul %161, %3, %cst_61 {dimension_numbers = #tpu.dot_dimension_numbers<[1], [0], [0], [1], [0, 0, 1, 1], [], []>} : vector<8x128xf32>, vector<128x128xf32>, vector<8x128xf32> -> vector<8x128xf32>
      %164 = arith.addf %162, %163 : vector<8x128xf32>
      %165 = math.tanh %164 : vector<8x128xf32>
      %166 = arith.negf %164 : vector<8x128xf32>
      %167 = math.exp %166 : vector<8x128xf32>
      %cst_62 = arith.constant 1.000000e+00 : f32
      %168 = vector.broadcast %cst_62 : f32 to vector<8x128xf32>
      %169 = arith.addf %168, %167 : vector<8x128xf32>
      %170 = arith.divf %168, %169 : vector<8x128xf32>
      %171 = arith.select %18, %165, %170 : vector<8x128xi1>, vector<8x128xf32>
      %c96_i32_63 = arith.constant 96 : i32
      %172 = tpu.dynamic_rotate %171 by %c96_i32_63 dim 1 : vector<8x128xf32>, i32 -> vector<8x128xf32>
      %c64_i32_64 = arith.constant 64 : i32
      %173 = tpu.dynamic_rotate %171 by %c64_i32_64 dim 1 : vector<8x128xf32>, i32 -> vector<8x128xf32>
      %c32_i32_65 = arith.constant 32 : i32
      %174 = tpu.dynamic_rotate %171 by %c32_i32_65 dim 1 : vector<8x128xf32>, i32 -> vector<8x128xf32>
      %175 = arith.mulf %172, %159 : vector<8x128xf32>
      %176 = arith.mulf %171, %173 : vector<8x128xf32>
      %177 = arith.addf %175, %176 : vector<8x128xf32>
      %178 = math.tanh %177 : vector<8x128xf32>
      %179 = arith.mulf %174, %178 : vector<8x128xf32>
      %180 = vector.extract_strided_slice %arg15 {offsets = [48, 0], sizes = [8, 128], strides = [1, 1]} : vector<64x128xf32> to vector<8x128xf32>
      %cst_66 = arith.constant dense<0.000000e+00> : vector<8x128xf32>
      %181 = tpu.matmul %179, %3, %cst_66 {dimension_numbers = #tpu.dot_dimension_numbers<[1], [0], [0], [1], [0, 0, 1, 1], [], []>} : vector<8x128xf32>, vector<128x128xf32>, vector<8x128xf32> -> vector<8x128xf32>
      %182 = arith.addf %180, %181 : vector<8x128xf32>
      %183 = math.tanh %182 : vector<8x128xf32>
      %184 = arith.negf %182 : vector<8x128xf32>
      %185 = math.exp %184 : vector<8x128xf32>
      %cst_67 = arith.constant 1.000000e+00 : f32
      %186 = vector.broadcast %cst_67 : f32 to vector<8x128xf32>
      %187 = arith.addf %186, %185 : vector<8x128xf32>
      %188 = arith.divf %186, %187 : vector<8x128xf32>
      %189 = arith.select %18, %183, %188 : vector<8x128xi1>, vector<8x128xf32>
      %c96_i32_68 = arith.constant 96 : i32
      %190 = tpu.dynamic_rotate %189 by %c96_i32_68 dim 1 : vector<8x128xf32>, i32 -> vector<8x128xf32>
      %c64_i32_69 = arith.constant 64 : i32
      %191 = tpu.dynamic_rotate %189 by %c64_i32_69 dim 1 : vector<8x128xf32>, i32 -> vector<8x128xf32>
      %c32_i32_70 = arith.constant 32 : i32
      %192 = tpu.dynamic_rotate %189 by %c32_i32_70 dim 1 : vector<8x128xf32>, i32 -> vector<8x128xf32>
      %193 = arith.mulf %190, %177 : vector<8x128xf32>
      %194 = arith.mulf %189, %191 : vector<8x128xf32>
      %195 = arith.addf %193, %194 : vector<8x128xf32>
      %196 = math.tanh %195 : vector<8x128xf32>
      %197 = arith.mulf %192, %196 : vector<8x128xf32>
      %198 = vector.extract_strided_slice %arg15 {offsets = [56, 0], sizes = [8, 128], strides = [1, 1]} : vector<64x128xf32> to vector<8x128xf32>
      %cst_71 = arith.constant dense<0.000000e+00> : vector<8x128xf32>
      %199 = tpu.matmul %197, %3, %cst_71 {dimension_numbers = #tpu.dot_dimension_numbers<[1], [0], [0], [1], [0, 0, 1, 1], [], []>} : vector<8x128xf32>, vector<128x128xf32>, vector<8x128xf32> -> vector<8x128xf32>
      %200 = arith.addf %198, %199 : vector<8x128xf32>
      %201 = math.tanh %200 : vector<8x128xf32>
      %202 = arith.negf %200 : vector<8x128xf32>
      %203 = math.exp %202 : vector<8x128xf32>
      %cst_72 = arith.constant 1.000000e+00 : f32
      %204 = vector.broadcast %cst_72 : f32 to vector<8x128xf32>
      %205 = arith.addf %204, %203 : vector<8x128xf32>
      %206 = arith.divf %204, %205 : vector<8x128xf32>
      %207 = arith.select %18, %201, %206 : vector<8x128xi1>, vector<8x128xf32>
      %c96_i32_73 = arith.constant 96 : i32
      %208 = tpu.dynamic_rotate %207 by %c96_i32_73 dim 1 : vector<8x128xf32>, i32 -> vector<8x128xf32>
      %c64_i32_74 = arith.constant 64 : i32
      %209 = tpu.dynamic_rotate %207 by %c64_i32_74 dim 1 : vector<8x128xf32>, i32 -> vector<8x128xf32>
      %c32_i32_75 = arith.constant 32 : i32
      %210 = tpu.dynamic_rotate %207 by %c32_i32_75 dim 1 : vector<8x128xf32>, i32 -> vector<8x128xf32>
      %211 = arith.mulf %208, %195 : vector<8x128xf32>
      %212 = arith.mulf %207, %209 : vector<8x128xf32>
      %213 = arith.addf %211, %212 : vector<8x128xf32>
      %214 = math.tanh %213 : vector<8x128xf32>
      %215 = arith.mulf %210, %214 : vector<8x128xf32>
      scf.yield %215, %213, %71 : vector<8x128xf32>, vector<8x128xf32>, vector<64x128xf32>
    }
    %c8_i32_21 = arith.constant 8 : i32
    %c0_22 = arith.constant 0 : index
    %c0_23 = arith.constant 0 : index
    %42 = vector.load %arg9[%c0_22, %c0_23] : memref<128x2xf32, #tpu.memory_space<vmem>>, vector<128x2xf32>
    %cst_24 = arith.constant dense<0.000000e+00> : vector<8x2xf32>
    %43 = tpu.matmul %41#0, %42, %cst_24 {dimension_numbers = #tpu.dot_dimension_numbers<[1], [0], [0], [1], [0, 0, 1, 1], [], []>} : vector<8x128xf32>, vector<128x2xf32>, vector<8x2xf32> -> vector<8x2xf32>
    %c0_25 = arith.constant 0 : index
    %c0_26 = arith.constant 0 : index
    %44 = vector.load %arg10[%c0_25, %c0_26] : memref<1x2xf32, #tpu.memory_space<vmem>>, vector<1x2xf32>
    %45 = vector.broadcast %44 : vector<1x2xf32> to vector<8x2xf32>
    %46 = arith.addf %43, %45 : vector<8x2xf32>
    %c0_27 = arith.constant 0 : index
    %c0_28 = arith.constant 0 : index
    %47 = vector.load %arg11[%c0_27, %c0_28] : memref<8x2xf32, #tpu.memory_space<vmem>>, vector<8x2xf32>
    tpu.vector_store %arg11[%c0_27, %c0_28], %46 {strides = array<i32>} : memref<8x2xf32, #tpu.memory_space<vmem>>, vector<8x2xf32>,
    return
  }
  func.func @transform_0(%arg0: i32) -> (i32, i32) {
    %c0_i32 = arith.constant 0 : i32
    %c0_i32_0 = arith.constant 0 : i32
    %c0_i32_1 = arith.constant 0 : i32
    return %c0_i32, %c0_i32_0 : i32, i32
  }
  func.func @transform_1(%arg0: i32) -> (i32, i32) {
    %c0_i32 = arith.constant 0 : i32
    %c0_i32_0 = arith.constant 0 : i32
    %c0_i32_1 = arith.constant 0 : i32
    return %c0_i32, %c0_i32_0 : i32, i32
  }
  func.func @transform_2(%arg0: i32) -> (i32, i32) {
    %c0_i32 = arith.constant 0 : i32
    %c0_i32_0 = arith.constant 0 : i32
    %c0_i32_1 = arith.constant 0 : i32
    return %c0_i32, %c0_i32_0 : i32, i32
  }
  func.func @transform_3(%arg0: i32) -> (i32, i32) {
    %c0_i32 = arith.constant 0 : i32
    %c0_i32_0 = arith.constant 0 : i32
    %c0_i32_1 = arith.constant 0 : i32
    return %c0_i32, %c0_i32_0 : i32, i32
  }
  func.func @transform_4(%arg0: i32) -> (i32, i32) {
    %c0_i32 = arith.constant 0 : i32
    %c0_i32_0 = arith.constant 0 : i32
    %c0_i32_1 = arith.constant 0 : i32
    return %c0_i32, %c0_i32_0 : i32, i32
  }
  func.func @transform_5(%arg0: i32) -> (i32, i32) {
    %c0_i32 = arith.constant 0 : i32
    %c0_i32_0 = arith.constant 0 : i32
    %c0_i32_1 = arith.constant 0 : i32
    return %c0_i32, %c0_i32_0 : i32, i32
  }
  func.func @transform_6(%arg0: i32) -> (i32, i32) {
    %c0_i32 = arith.constant 0 : i32
    %c0_i32_0 = arith.constant 0 : i32
    %c0_i32_1 = arith.constant 0 : i32
    return %c0_i32, %c0_i32_0 : i32, i32
  }
  func.func @transform_7(%arg0: i32) -> (i32, i32) {
    %c0_i32 = arith.constant 0 : i32
    %c0_i32_0 = arith.constant 0 : i32
    %c0_i32_1 = arith.constant 0 : i32
    return %c0_i32, %c0_i32_0 : i32, i32
  }
  func.func @transform_8(%arg0: i32) -> (i32, i32) {
    %c0_i32 = arith.constant 0 : i32
    %c0_i32_0 = arith.constant 0 : i32
    %c0_i32_1 = arith.constant 0 : i32
    return %c0_i32, %c0_i32_0 : i32, i32
  }
  func.func @transform_9(%arg0: i32) -> (i32, i32) {
    %c0_i32 = arith.constant 0 : i32
    %c0_i32_0 = arith.constant 0 : i32
    %c0_i32_1 = arith.constant 0 : i32
    return %c0_i32, %c0_i32_0 : i32, i32
  }
  func.func @transform_10(%arg0: i32) -> (i32, i32) {
    %c0_i32 = arith.constant 0 : i32
    %c0_i32_0 = arith.constant 0 : i32
    %c0_i32_1 = arith.constant 0 : i32
    return %c0_i32, %c0_i32_0 : i32, i32
  }
}

</mosaic_0001>

<llo_original>
// kernel: combined_model_forward.1
$region0: #{combined_model_forward.1}
  #allocation0 [shape = 'u32[]', space=smem, size = 0x4, offset = 0x4, fixed_abs, tag = 'smem constant byte address 0x4 - core index']
  #allocation1 [shape = 'u32[144,128]{1,0:T(1,128)}', space=vmem, size = 0x12000, scoped, tag = 'internal scratch']
  %s0 = inlined_call_operand.vmem [shape: f32[512,32], index: 0, kind: input, shape index: {}]
  %s1 = inlined_call_operand.vmem [shape: f32[32,16], index: 1, kind: input, shape index: {}]
  %s2 = inlined_call_operand.vmem [shape: f32[1,16], index: 2, kind: input, shape index: {}]
  %s3 = inlined_call_operand.vmem [shape: f32[16,32], index: 3, kind: input, shape index: {}]
  %s4 = inlined_call_operand.vmem [shape: f32[1,32], index: 4, kind: input, shape index: {}]
  %s5 = inlined_call_operand.vmem [shape: f32[32,128], index: 5, kind: input, shape index: {}]
  %s6 = inlined_call_operand.vmem [shape: f32[128,128], index: 6, kind: input, shape index: {}]
  %s7 = inlined_call_operand.vmem [shape: f32[1,128], index: 7, kind: input, shape index: {}]
  %s8 = inlined_call_operand.vmem [shape: f32[128,2], index: 8, kind: input, shape index: {}]
  %s9 = inlined_call_operand.vmem [shape: f32[1,2], index: 9, kind: input, shape index: {}]
  %s10 = inlined_call_operand.vmem [shape: f32[8,2], index: 10, kind: output, shape index: {}]
  %s11 = sld [smem:[#allocation0]]
  $region57: #{combined_model_forward.1} parent=0
    _
  %s13 = ssub.s32 1, %s11
  %s14 = scalar_select 0, %s13, %s11
  // Predicated region
  $region2: #{combined_model_forward.1} parent=0 // pred_check
    _
  $region3: #{combined_model_forward.1} parent=0 // pred_check_branch
    %16 = sbr.rel (0) target = $region5
  $region4: #{combined_model_forward.1} parent=0 // pred_region
    _
  $region5: #{combined_model_forward.1} parent=0 // pred_fallthru
    _
  // Predicated region
  $region6: #{combined_model_forward.1} parent=0 // pred_check
    _
  $region7: #{combined_model_forward.1} parent=0 // pred_check_branch
    %18 = sbr.rel (0) target = $region9
  $region8: #{combined_model_forward.1} parent=0 // pred_region
    _
  $region9: #{combined_model_forward.1} parent=0 // pred_fallthru
    _
  // Predicated region
  $region10: #{combined_model_forward.1} parent=0 // pred_check
    _
  $region11: #{combined_model_forward.1} parent=0 // pred_check_branch
    %20 = sbr.rel (0) target = $region13
  $region12: #{combined_model_forward.1} parent=0 // pred_region
    _
  $region13: #{combined_model_forward.1} parent=0 // pred_fallthru
    _
  // Predicated region
  $region14: #{combined_model_forward.1} parent=0 // pred_check
    _
  $region15: #{combined_model_forward.1} parent=0 // pred_check_branch
    %22 = sbr.rel (0) target = $region17
  $region16: #{combined_model_forward.1} parent=0 // pred_region
    _
  $region17: #{combined_model_forward.1} parent=0 // pred_fallthru
    _
  // Predicated region
  $region18: #{combined_model_forward.1} parent=0 // pred_check
    _
  $region19: #{combined_model_forward.1} parent=0 // pred_check_branch
    %24 = sbr.rel (0) target = $region21
  $region20: #{combined_model_forward.1} parent=0 // pred_region
    _
  $region21: #{combined_model_forward.1} parent=0 // pred_fallthru
    _
  // Predicated region
  $region22: #{combined_model_forward.1} parent=0 // pred_check
    _
  $region23: #{combined_model_forward.1} parent=0 // pred_check_branch
    %26 = sbr.rel (0) target = $region25
  $region24: #{combined_model_forward.1} parent=0 // pred_region
    _
  $region25: #{combined_model_forward.1} parent=0 // pred_fallthru
    _
  // Predicated region
  $region26: #{combined_model_forward.1} parent=0 // pred_check
    _
  $region27: #{combined_model_forward.1} parent=0 // pred_check_branch
    %28 = sbr.rel (0) target = $region29
  $region28: #{combined_model_forward.1} parent=0 // pred_region
    _
  $region29: #{combined_model_forward.1} parent=0 // pred_fallthru
    _
  // Predicated region
  $region30: #{combined_model_forward.1} parent=0 // pred_check
    _
  $region31: #{combined_model_forward.1} parent=0 // pred_check_branch
    %30 = sbr.rel (0) target = $region33
  $region32: #{combined_model_forward.1} parent=0 // pred_region
    _
  $region33: #{combined_model_forward.1} parent=0 // pred_fallthru
    _
  // Predicated region
  $region34: #{combined_model_forward.1} parent=0 // pred_check
    _
  $region35: #{combined_model_forward.1} parent=0 // pred_check_branch
    %32 = sbr.rel (0) target = $region37
  $region36: #{combined_model_forward.1} parent=0 // pred_region
    _
  $region37: #{combined_model_forward.1} parent=0 // pred_fallthru
    _
  // Predicated region
  $region38: #{combined_model_forward.1} parent=0 // pred_check
    _
  $region39: #{combined_model_forward.1} parent=0 // pred_check_branch
    %34 = sbr.rel (0) target = $region41
  $region40: #{combined_model_forward.1} parent=0 // pred_region
    _
  $region41: #{combined_model_forward.1} parent=0 // pred_fallthru
    _
  %v35 = vld [vmem:[%s1] sm:$0xff]
  %v36 = vld [vmem:[%s1 + $0x8] sm:$0xff]
  %v37 = vld [vmem:[%s1 + $0x10] sm:$0xff]
  %v38 = vld [vmem:[%s1 + $0x18] sm:$0xff]
  %v39 = vld [vmem:[%s3] sm:$0xff]
  %v40 = vld [vmem:[%s3 + $0x8] sm:$0xff]
  %v41 = vld [vmem:[%s5] sm:$0xff]
  %v42 = vld [vmem:[%s5 + $0x8] sm:$0xff]
  %v43 = vld [vmem:[%s5 + $0x10] sm:$0xff]
  %v44 = vld [vmem:[%s5 + $0x18] sm:$0xff]
  %v45 = vld [vmem:[%s6] sm:$0xff]
  %v46 = vld [vmem:[%s6 + $0x8] sm:$0xff]
  %v47 = vld [vmem:[%s6 + $0x10] sm:$0xff]
  %v48 = vld [vmem:[%s6 + $0x18] sm:$0xff]
  %v49 = vld [vmem:[%s6 + $0x20] sm:$0xff]
  %v50 = vld [vmem:[%s6 + $0x28] sm:$0xff]
  %v51 = vld [vmem:[%s6 + $0x30] sm:$0xff]
  %v52 = vld [vmem:[%s6 + $0x38] sm:$0xff]
  %v53 = vld [vmem:[%s6 + $0x40] sm:$0xff]
  %v54 = vld [vmem:[%s6 + $0x48] sm:$0xff]
  %v55 = vld [vmem:[%s6 + $0x50] sm:$0xff]
  %v56 = vld [vmem:[%s6 + $0x58] sm:$0xff]
  %v57 = vld [vmem:[%s6 + $0x60] sm:$0xff]
  %v58 = vld [vmem:[%s6 + $0x68] sm:$0xff]
  %v59 = vld [vmem:[%s6 + $0x70] sm:$0xff]
  %v60 = vld [vmem:[%s6 + $0x78] sm:$0xff]
  %v61 = vld [vmem:[%s2] sm:$0x1]
  %v63 = vlaneseq
  %v64 = vshrl.u32 %v63, 7
  %v65 = vsub.s32 0, %v64
  %v66 = vrot.slane %v61, %v65
  %v68 = vld [vmem:[%s4] sm:$0x1]
  %v70 = vlaneseq
  %v71 = vshrl.u32 %v70, 7
  %v72 = vsub.s32 0, %v71
  %v73 = vrot.slane %v68, %v72
  %v75 = vld [vmem:[%s7] sm:$0x1]
  %v77 = vlaneseq
  %v78 = vshrl.u32 %v77, 7
  %v79 = vsub.s32 0, %v78
  %v80 = vrot.slane %v75, %v79
  %v82 = vlaneseq
  %v83 = vand.u32 %v82, 127
  %vm84 = vcmp.ge.s32.totalorder %v83, 64
  %vm85 = vcmp.lt.s32.totalorder %v83, 96
  %vm86 = vmand %vm84, %vm85
  %v87 = vld [vmem:[%s0] sm:$0xff]
  %v88 = vld [vmem:[%s0 + $0x8] sm:$0xff]
  %v89 = vld [vmem:[%s0 + $0x10] sm:$0xff]
  %v90 = vld [vmem:[%s0 + $0x18] sm:$0xff]
  %v91 = vld [vmem:[%s0 + $0x20] sm:$0xff]
  %v92 = vld [vmem:[%s0 + $0x28] sm:$0xff]
  %v93 = vld [vmem:[%s0 + $0x30] sm:$0xff]
  %v94 = vld [vmem:[%s0 + $0x38] sm:$0xff]
  %vm95 = vcmask 261120
  %v97 = vsel %vm95, %v87, 0
  %v100 = vsel %vm95, %v88, 0
  %v103 = vsel %vm95, %v89, 0
  %v106 = vsel %vm95, %v90, 0
  %v109 = vsel %vm95, %v91, 0
  %v112 = vsel %vm95, %v92, 0
  %v115 = vsel %vm95, %v93, 0
  %v118 = vsel %vm95, %v94, 0
  %120 = vmatprep.subr.mxu0 0.0
  %121 = vmatpush1.msra.mxu0 0.0
  %122 = vmatprep.subr.mxu0 0.0
  %123 = vmatpush1.msra.mxu0 0.0
  %124 = vmatprep.subr.mxu0 0.0
  %125 = vmatpush1.msra.mxu0 0.0
  %126 = vmatprep.subr.mxu0 0.0
  %127 = vmatpush1.msra.mxu0 0.0
  %128 = vmatprep.subr.mxu0 0.0
  %129 = vmatpush1.msra.mxu0 0.0
  %130 = vmatprep.subr.mxu0 0.0
  %131 = vmatpush1.msra.mxu0 0.0
  %132 = vmatprep.subr.mxu0 0.0
  %133 = vmatpush1.msra.mxu0 0.0
  %134 = vmatprep.subr.mxu0 0.0
  %135 = vmatpush1.msra.mxu0 0.0
  %136 = vmatprep.subr.mxu0 0.0
  %137 = vmatpush1.msra.mxu0 0.0
  %138 = vmatprep.subr.mxu0 0.0
  %139 = vmatpush1.msra.mxu0 0.0
  %140 = vmatprep.subr.mxu0 0.0
  %141 = vmatpush1.msra.mxu0 0.0
  %142 = vmatprep.subr.mxu0 0.0
  %143 = vmatpush1.msra.mxu0 0.0
  %144 = vmatprep.subr.mxu0 0.0
  %145 = vmatpush1.msra.mxu0 %v38
  %146 = vmatprep.subr.mxu0 0.0
  %147 = vmatpush1.msra.mxu0 %v37
  %148 = vmatprep.subr.mxu0 0.0
  %149 = vmatpush1.msra.mxu0 %v36
  %150 = vmatprep.subr.mxu0 0.0
  %151 = vmatpush1.msra.mxu0 %v35
  %152 = vmatprep.subr.mxu0 0.0
  %153 = vmatpush2.msra.mxu0 0.0
  %154 = vmatprep.subr.mxu0 0.0
  %155 = vmatpush2.msra.mxu0 0.0
  %156 = vmatprep.subr.mxu0 0.0
  %157 = vmatpush2.msra.mxu0 0.0
  %158 = vmatprep.subr.mxu0 0.0
  %159 = vmatpush2.msra.mxu0 0.0
  %160 = vmatprep.subr.mxu0 0.0
  %161 = vmatpush2.msra.mxu0 0.0
  %162 = vmatprep.subr.mxu0 0.0
  %163 = vmatpush2.msra.mxu0 0.0
  %164 = vmatprep.subr.mxu0 0.0
  %165 = vmatpush2.msra.mxu0 0.0
  %166 = vmatprep.subr.mxu0 0.0
  %167 = vmatpush2.msra.mxu0 0.0
  %168 = vmatprep.subr.mxu0 0.0
  %169 = vmatpush2.msra.mxu0 0.0
  %170 = vmatprep.subr.mxu0 0.0
  %171 = vmatpush2.msra.mxu0 0.0
  %172 = vmatprep.subr.mxu0 0.0
  %173 = vmatpush2.msra.mxu0 0.0
  %174 = vmatprep.subr.mxu0 0.0
  %175 = vmatpush2.msra.mxu0 0.0
  %176 = vmatprep.subr.mxu0 0.0
  %177 = vmatpush2.msra.mxu0 0.0
  %178 = vmatprep.subr.mxu0 0.0
  %179 = vmatpush2.msra.mxu0 0.0
  %180 = vmatprep.subr.mxu0 0.0
  %181 = vmatpush2.msra.mxu0 0.0
  %182 = vmatprep.subr.mxu0 0.0
  %183 = vmatpush2.msra.mxu0 0.0
  %184 = vmatprep.mubr.f32.mxu0 0.0
  %185 = vmatmul.mubr.f32.gmra.mxu0 %v97
  %v186 = vpop.f32.mrf.mxu0
  %v187 = vadd.f32 %v66, %v186
  %v188 = vpop.f32.mrf.mxu0
  %189 = vmatprep.mubr.f32.mxu0 0.0
  %190 = vmatmul.mubr.f32.gmra.mxu0 %v100
  %v191 = vpop.f32.mrf.mxu0
  %v192 = vadd.f32 %v66, %v191
  %v193 = vpop.f32.mrf.mxu0
  %194 = vmatprep.mubr.f32.mxu0 0.0
  %195 = vmatmul.mubr.f32.gmra.mxu0 %v103
  %v196 = vpop.f32.mrf.mxu0
  %v197 = vadd.f32 %v66, %v196
  %v198 = vpop.f32.mrf.mxu0
  %199 = vmatprep.mubr.f32.mxu0 0.0
  %200 = vmatmul.mubr.f32.gmra.mxu0 %v106
  %v201 = vpop.f32.mrf.mxu0
  %v202 = vadd.f32 %v66, %v201
  %v203 = vpop.f32.mrf.mxu0
  %204 = vmatprep.mubr.f32.mxu0 0.0
  %205 = vmatmul.mubr.f32.gmra.mxu0 %v109
  %v206 = vpop.f32.mrf.mxu0
  %v207 = vadd.f32 %v66, %v206
  %v208 = vpop.f32.mrf.mxu0
  %209 = vmatprep.mubr.f32.mxu0 0.0
  %210 = vmatmul.mubr.f32.gmra.mxu0 %v112
  %v211 = vpop.f32.mrf.mxu0
  %v212 = vadd.f32 %v66, %v211
  %v213 = vpop.f32.mrf.mxu0
  %214 = vmatprep.mubr.f32.mxu0 0.0
  %215 = vmatmul.mubr.f32.gmra.mxu0 %v115
  %v216 = vpop.f32.mrf.mxu0
  %v217 = vadd.f32 %v66, %v216
  %v218 = vpop.f32.mrf.mxu0
  %219 = vmatprep.mubr.f32.mxu0 0.0
  %220 = vmatmul.mubr.f32.gmra.mxu0 %v118
  %v221 = vpop.f32.mrf.mxu0
  %v222 = vadd.f32 %v66, %v221
  %v223 = vpop.f32.mrf.mxu0
  %224 = vdwg.mxu0
  %v225 = vxor.u32 %v187, 2147483648
  %v226 = vxor.u32 %v192, 2147483648
  %v227 = vxor.u32 %v197, 2147483648
  %v228 = vxor.u32 %v202, 2147483648
  %v229 = vxor.u32 %v207, 2147483648
  %v230 = vxor.u32 %v212, 2147483648
  %v231 = vxor.u32 %v217, 2147483648
  %v232 = vxor.u32 %v222, 2147483648
  %v233 = vmul.f32 %v225, 1.442695
  %v234 = vpow.pop %v233
  %v235 = vmul.f32 %v226, 1.442695
  %v236 = vpow.pop %v235
  %v237 = vmul.f32 %v227, 1.442695
  %v238 = vpow.pop %v237
  %v239 = vmul.f32 %v228, 1.442695
  %v240 = vpow.pop %v239
  %v241 = vmul.f32 %v229, 1.442695
  %v242 = vpow.pop %v241
  %v243 = vmul.f32 %v230, 1.442695
  %v244 = vpow.pop %v243
  %v245 = vmul.f32 %v231, 1.442695
  %v246 = vpow.pop %v245
  %v247 = vmul.f32 %v232, 1.442695
  %v248 = vpow.pop %v247
  %v249 = vadd.f32 %v234, 1.0
  %v250 = vadd.f32 %v236, 1.0
  %v251 = vadd.f32 %v238, 1.0
  %v252 = vadd.f32 %v240, 1.0
  %v253 = vadd.f32 %v242, 1.0
  %v254 = vadd.f32 %v244, 1.0
  %v255 = vadd.f32 %v246, 1.0
  %v256 = vadd.f32 %v248, 1.0
  %v257 = vrcp.pop %v249
  %v258 = vmul.f32 1.0, %v257
  %v259 = vrcp.pop %v250
  %v260 = vmul.f32 1.0, %v259
  %v261 = vrcp.pop %v251
  %v262 = vmul.f32 1.0, %v261
  %v263 = vrcp.pop %v252
  %v264 = vmul.f32 1.0, %v263
  %v265 = vrcp.pop %v253
  %v266 = vmul.f32 1.0, %v265
  %v267 = vrcp.pop %v254
  %v268 = vmul.f32 1.0, %v267
  %v269 = vrcp.pop %v255
  %v270 = vmul.f32 1.0, %v269
  %v271 = vrcp.pop %v256
  %v272 = vmul.f32 1.0, %v271
  %v273 = vmul.f32 %v187, %v258
  %v274 = vmul.f32 %v192, %v260
  %v275 = vmul.f32 %v197, %v262
  %v276 = vmul.f32 %v202, %v264
  %v277 = vmul.f32 %v207, %v266
  %v278 = vmul.f32 %v212, %v268
  %v279 = vmul.f32 %v217, %v270
  %v280 = vmul.f32 %v222, %v272
  %vm281 = vcmask 130048
  %v283 = vsel %vm281, %v273, 0
  %v286 = vsel %vm281, %v274, 0
  %v289 = vsel %vm281, %v275, 0
  %v292 = vsel %vm281, %v276, 0
  %v295 = vsel %vm281, %v277, 0
  %v298 = vsel %vm281, %v278, 0
  %v301 = vsel %vm281, %v279, 0
  %v304 = vsel %vm281, %v280, 0
  %306 = vmatprep.subr.mxu0 0.0
  %307 = vmatpush1.msra.mxu0 0.0
  %308 = vmatprep.subr.mxu0 0.0
  %309 = vmatpush1.msra.mxu0 0.0
  %310 = vmatprep.subr.mxu0 0.0
  %311 = vmatpush1.msra.mxu0 0.0
  %312 = vmatprep.subr.mxu0 0.0
  %313 = vmatpush1.msra.mxu0 0.0
  %314 = vmatprep.subr.mxu0 0.0
  %315 = vmatpush1.msra.mxu0 0.0
  %316 = vmatprep.subr.mxu0 0.0
  %317 = vmatpush1.msra.mxu0 0.0
  %318 = vmatprep.subr.mxu0 0.0
  %319 = vmatpush1.msra.mxu0 0.0
  %320 = vmatprep.subr.mxu0 0.0
  %321 = vmatpush1.msra.mxu0 0.0
  %322 = vmatprep.subr.mxu0 0.0
  %323 = vmatpush1.msra.mxu0 0.0
  %324 = vmatprep.subr.mxu0 0.0
  %325 = vmatpush1.msra.mxu0 0.0
  %326 = vmatprep.subr.mxu0 0.0
  %327 = vmatpush1.msra.mxu0 0.0
  %328 = vmatprep.subr.mxu0 0.0
  %329 = vmatpush1.msra.mxu0 0.0
  %330 = vmatprep.subr.mxu0 0.0
  %331 = vmatpush1.msra.mxu0 0.0
  %332 = vmatprep.subr.mxu0 0.0
  %333 = vmatpush1.msra.mxu0 0.0
  %334 = vmatprep.subr.mxu0 0.0
  %335 = vmatpush1.msra.mxu0 %v40
  %336 = vmatprep.subr.mxu0 0.0
  %337 = vmatpush1.msra.mxu0 %v39
  %338 = vmatprep.subr.mxu0 0.0
  %339 = vmatpush2.msra.mxu0 0.0
  %340 = vmatprep.subr.mxu0 0.0
  %341 = vmatpush2.msra.mxu0 0.0
  %342 = vmatprep.subr.mxu0 0.0
  %343 = vmatpush2.msra.mxu0 0.0
  %344 = vmatprep.subr.mxu0 0.0
  %345 = vmatpush2.msra.mxu0 0.0
  %346 = vmatprep.subr.mxu0 0.0
  %347 = vmatpush2.msra.mxu0 0.0
  %348 = vmatprep.subr.mxu0 0.0
  %349 = vmatpush2.msra.mxu0 0.0
  %350 = vmatprep.subr.mxu0 0.0
  %351 = vmatpush2.msra.mxu0 0.0
  %352 = vmatprep.subr.mxu0 0.0
  %353 = vmatpush2.msra.mxu0 0.0
  %354 = vmatprep.subr.mxu0 0.0
  %355 = vmatpush2.msra.mxu0 0.0
  %356 = vmatprep.subr.mxu0 0.0
  %357 = vmatpush2.msra.mxu0 0.0
  %358 = vmatprep.subr.mxu0 0.0
  %359 = vmatpush2.msra.mxu0 0.0
  %360 = vmatprep.subr.mxu0 0.0
  %361 = vmatpush2.msra.mxu0 0.0
  %362 = vmatprep.subr.mxu0 0.0
  %363 = vmatpush2.msra.mxu0 0.0
  %364 = vmatprep.subr.mxu0 0.0
  %365 = vmatpush2.msra.mxu0 0.0
  %366 = vmatprep.subr.mxu0 0.0
  %367 = vmatpush2.msra.mxu0 0.0
  %368 = vmatprep.subr.mxu0 0.0
  %369 = vmatpush2.msra.mxu0 0.0
  %370 = vmatprep.mubr.f32.mxu0 0.0
  %371 = vmatmul.mubr.f32.gmra.mxu0 %v283
  %v372 = vpop.f32.mrf.mxu0
  %v373 = vadd.f32 %v73, %v372
  %v374 = vpop.f32.mrf.mxu0
  %375 = vmatprep.mubr.f32.mxu0 0.0
  %376 = vmatmul.mubr.f32.gmra.mxu0 %v286
  %v377 = vpop.f32.mrf.mxu0
  %v378 = vadd.f32 %v73, %v377
  %v379 = vpop.f32.mrf.mxu0
  %380 = vmatprep.mubr.f32.mxu0 0.0
  %381 = vmatmul.mubr.f32.gmra.mxu0 %v289
  %v382 = vpop.f32.mrf.mxu0
  %v383 = vadd.f32 %v73, %v382
  %v384 = vpop.f32.mrf.mxu0
  %385 = vmatprep.mubr.f32.mxu0 0.0
  %386 = vmatmul.mubr.f32.gmra.mxu0 %v292
  %v387 = vpop.f32.mrf.mxu0
  %v388 = vadd.f32 %v73, %v387
  %v389 = vpop.f32.mrf.mxu0
  %390 = vmatprep.mubr.f32.mxu0 0.0
  %391 = vmatmul.mubr.f32.gmra.mxu0 %v295
  %v392 = vpop.f32.mrf.mxu0
  %v393 = vadd.f32 %v73, %v392
  %v394 = vpop.f32.mrf.mxu0
  %395 = vmatprep.mubr.f32.mxu0 0.0
  %396 = vmatmul.mubr.f32.gmra.mxu0 %v298
  %v397 = vpop.f32.mrf.mxu0
  %v398 = vadd.f32 %v73, %v397
  %v399 = vpop.f32.mrf.mxu0
  %400 = vmatprep.mubr.f32.mxu0 0.0
  %401 = vmatmul.mubr.f32.gmra.mxu0 %v301
  %v402 = vpop.f32.mrf.mxu0
  %v403 = vadd.f32 %v73, %v402
  %v404 = vpop.f32.mrf.mxu0
  %405 = vmatprep.mubr.f32.mxu0 0.0
  %406 = vmatmul.mubr.f32.gmra.mxu0 %v304
  %v407 = vpop.f32.mrf.mxu0
  %v408 = vadd.f32 %v73, %v407
  %v409 = vpop.f32.mrf.mxu0
  %410 = vdwg.mxu0
  %v411 = vxor.u32 %v373, 2147483648
  %v412 = vxor.u32 %v378, 2147483648
  %v413 = vxor.u32 %v383, 2147483648
  %v414 = vxor.u32 %v388, 2147483648
  %v415 = vxor.u32 %v393, 2147483648
  %v416 = vxor.u32 %v398, 2147483648
  %v417 = vxor.u32 %v403, 2147483648
  %v418 = vxor.u32 %v408, 2147483648
  %v419 = vmul.f32 %v411, 1.442695
  %v420 = vpow.pop %v419
  %v421 = vmul.f32 %v412, 1.442695
  %v422 = vpow.pop %v421
  %v423 = vmul.f32 %v413, 1.442695
  %v424 = vpow.pop %v423
  %v425 = vmul.f32 %v414, 1.442695
  %v426 = vpow.pop %v425
  %v427 = vmul.f32 %v415, 1.442695
  %v428 = vpow.pop %v427
  %v429 = vmul.f32 %v416, 1.442695
  %v430 = vpow.pop %v429
  %v431 = vmul.f32 %v417, 1.442695
  %v432 = vpow.pop %v431
  %v433 = vmul.f32 %v418, 1.442695
  %v434 = vpow.pop %v433
  %v435 = vadd.f32 %v420, 1.0
  %v436 = vadd.f32 %v422, 1.0
  %v437 = vadd.f32 %v424, 1.0
  %v438 = vadd.f32 %v426, 1.0
  %v439 = vadd.f32 %v428, 1.0
  %v440 = vadd.f32 %v430, 1.0
  %v441 = vadd.f32 %v432, 1.0
  %v442 = vadd.f32 %v434, 1.0
  %v443 = vrcp.pop %v435
  %v444 = vmul.f32 1.0, %v443
  %v445 = vrcp.pop %v436
  %v446 = vmul.f32 1.0, %v445
  %v447 = vrcp.pop %v437
  %v448 = vmul.f32 1.0, %v447
  %v449 = vrcp.pop %v438
  %v450 = vmul.f32 1.0, %v449
  %v451 = vrcp.pop %v439
  %v452 = vmul.f32 1.0, %v451
  %v453 = vrcp.pop %v440
  %v454 = vmul.f32 1.0, %v453
  %v455 = vrcp.pop %v441
  %v456 = vmul.f32 1.0, %v455
  %v457 = vrcp.pop %v442
  %v458 = vmul.f32 1.0, %v457
  %v459 = vmul.f32 %v373, %v444
  %v460 = vmul.f32 %v378, %v446
  %v461 = vmul.f32 %v383, %v448
  %v462 = vmul.f32 %v388, %v450
  %v463 = vmul.f32 %v393, %v452
  %v464 = vmul.f32 %v398, %v454
  %v465 = vmul.f32 %v403, %v456
  %v466 = vmul.f32 %v408, %v458
  %v468 = vsel %vm95, %v459, 0
  %v471 = vsel %vm95, %v460, 0
  %v474 = vsel %vm95, %v461, 0
  %v477 = vsel %vm95, %v462, 0
  %v480 = vsel %vm95, %v463, 0
  %v483 = vsel %vm95, %v464, 0
  %v486 = vsel %vm95, %v465, 0
  %v489 = vsel %vm95, %v466, 0
  %491 = vmatprep.subr.mxu0 0.0
  %492 = vmatpush1.msra.mxu0 0.0
  %493 = vmatprep.subr.mxu0 0.0
  %494 = vmatpush1.msra.mxu0 0.0
  %495 = vmatprep.subr.mxu0 0.0
  %496 = vmatpush1.msra.mxu0 0.0
  %497 = vmatprep.subr.mxu0 0.0
  %498 = vmatpush1.msra.mxu0 0.0
  %499 = vmatprep.subr.mxu0 0.0
  %500 = vmatpush1.msra.mxu0 0.0
  %501 = vmatprep.subr.mxu0 0.0
  %502 = vmatpush1.msra.mxu0 0.0
  %503 = vmatprep.subr.mxu0 0.0
  %504 = vmatpush1.msra.mxu0 0.0
  %505 = vmatprep.subr.mxu0 0.0
  %506 = vmatpush1.msra.mxu0 0.0
  %507 = vmatprep.subr.mxu0 0.0
  %508 = vmatpush1.msra.mxu0 0.0
  %509 = vmatprep.subr.mxu0 0.0
  %510 = vmatpush1.msra.mxu0 0.0
  %511 = vmatprep.subr.mxu0 0.0
  %512 = vmatpush1.msra.mxu0 0.0
  %513 = vmatprep.subr.mxu0 0.0
  %514 = vmatpush1.msra.mxu0 0.0
  %515 = vmatprep.subr.mxu0 0.0
  %516 = vmatpush1.msra.mxu0 %v44
  %517 = vmatprep.subr.mxu0 0.0
  %518 = vmatpush1.msra.mxu0 %v43
  %519 = vmatprep.subr.mxu0 0.0
  %520 = vmatpush1.msra.mxu0 %v42
  %521 = vmatprep.subr.mxu0 0.0
  %522 = vmatpush1.msra.mxu0 %v41
  %523 = vmatprep.subr.mxu0 0.0
  %524 = vmatpush2.msra.mxu0 0.0
  %525 = vmatprep.subr.mxu0 0.0
  %526 = vmatpush2.msra.mxu0 0.0
  %527 = vmatprep.subr.mxu0 0.0
  %528 = vmatpush2.msra.mxu0 0.0
  %529 = vmatprep.subr.mxu0 0.0
  %530 = vmatpush2.msra.mxu0 0.0
  %531 = vmatprep.subr.mxu0 0.0
  %532 = vmatpush2.msra.mxu0 0.0
  %533 = vmatprep.subr.mxu0 0.0
  %534 = vmatpush2.msra.mxu0 0.0
  %535 = vmatprep.subr.mxu0 0.0
  %536 = vmatpush2.msra.mxu0 0.0
  %537 = vmatprep.subr.mxu0 0.0
  %538 = vmatpush2.msra.mxu0 0.0
  %539 = vmatprep.subr.mxu0 0.0
  %540 = vmatpush2.msra.mxu0 0.0
  %541 = vmatprep.subr.mxu0 0.0
  %542 = vmatpush2.msra.mxu0 0.0
  %543 = vmatprep.subr.mxu0 0.0
  %544 = vmatpush2.msra.mxu0 0.0
  %545 = vmatprep.subr.mxu0 0.0
  %546 = vmatpush2.msra.mxu0 0.0
  %547 = vmatprep.subr.mxu0 0.0
  %548 = vmatpush2.msra.mxu0 0.0
  %549 = vmatprep.subr.mxu0 0.0
  %550 = vmatpush2.msra.mxu0 0.0
  %551 = vmatprep.subr.mxu0 0.0
  %552 = vmatpush2.msra.mxu0 0.0
  %553 = vmatprep.subr.mxu0 0.0
  %554 = vmatpush2.msra.mxu0 0.0
  %555 = vmatprep.mubr.f32.mxu0 0.0
  %556 = vmatmul.mubr.f32.gmra.mxu0 %v468
  %v557 = vpop.f32.mrf.mxu0
  %v558 = vadd.f32 %v80, %v557
  %v559 = vpop.f32.mrf.mxu0
  %560 = vmatprep.mubr.f32.mxu0 0.0
  %561 = vmatmul.mubr.f32.gmra.mxu0 %v471
  %v562 = vpop.f32.mrf.mxu0
  %v563 = vadd.f32 %v80, %v562
  %v564 = vpop.f32.mrf.mxu0
  %565 = vmatprep.mubr.f32.mxu0 0.0
  %566 = vmatmul.mubr.f32.gmra.mxu0 %v474
  %v567 = vpop.f32.mrf.mxu0
  %v568 = vadd.f32 %v80, %v567
  %v569 = vpop.f32.mrf.mxu0
  %570 = vmatprep.mubr.f32.mxu0 0.0
  %571 = vmatmul.mubr.f32.gmra.mxu0 %v477
  %v572 = vpop.f32.mrf.mxu0
  %v573 = vadd.f32 %v80, %v572
  %v574 = vpop.f32.mrf.mxu0
  %575 = vmatprep.mubr.f32.mxu0 0.0
  %576 = vmatmul.mubr.f32.gmra.mxu0 %v480
  %v577 = vpop.f32.mrf.mxu0
  %v578 = vadd.f32 %v80, %v577
  %v579 = vpop.f32.mrf.mxu0
  %580 = vmatprep.mubr.f32.mxu0 0.0
  %581 = vmatmul.mubr.f32.gmra.mxu0 %v483
  %v582 = vpop.f32.mrf.mxu0
  %v583 = vadd.f32 %v80, %v582
  %v584 = vpop.f32.mrf.mxu0
  %585 = vmatprep.mubr.f32.mxu0 0.0
  %586 = vmatmul.mubr.f32.gmra.mxu0 %v486
  %v587 = vpop.f32.mrf.mxu0
  %v588 = vadd.f32 %v80, %v587
  %v589 = vpop.f32.mrf.mxu0
  %590 = vmatprep.mubr.f32.mxu0 0.0
  %591 = vmatmul.mubr.f32.gmra.mxu0 %v489
  %v592 = vpop.f32.mrf.mxu0
  %v593 = vadd.f32 %v80, %v592
  %v594 = vpop.f32.mrf.mxu0
  %595 = vdwg.mxu0
  loop: start=0, step=1, limit=8
  $region42: #{combined_model_forward.1} parent=0 // loop_pre_header
    _
  $region43: #{combined_model_forward.1} parent=0 // loop_header
    %s597 = sphi 0, %s601
    %p598 = scmp.ge.s32.totalorder %s597, 8
    %v602 = vphi 0.0, %v1843
    %v603 = vphi 0.0, %v1841
    %v604 = vphi %v558, %v1086
    %v605 = vphi %v563, %v1091
    %v606 = vphi %v568, %v1096
    %v607 = vphi %v573, %v1101
    %v608 = vphi %v578, %v1106
    %v609 = vphi %v583, %v1111
    %v610 = vphi %v588, %v1116
    %v611 = vphi %v593, %v1121
  $region44: #{combined_model_forward.1} parent=0 // loop_header_branch
    %600 = sbr.rel (%p598) target = $region48
  $region45: #{combined_model_forward.1} parent=0 // loop_body
    %s612 = sadd.s32 %s597, 1
    %p613 = scmp.lt.s32.totalorder %s612, 7
    %s614 = scalar_select %p613, %s612, 7
    %s615 = smul.u32 %s614, 64
    %s616 = scalar_lea.vmem %s0, %s615
    %v617 = vld [vmem:[%s616] sm:$0xff]
    %v618 = vld [vmem:[%s616 + $0x8] sm:$0xff]
    %v619 = vld [vmem:[%s616 + $0x10] sm:$0xff]
    %v620 = vld [vmem:[%s616 + $0x18] sm:$0xff]
    %v621 = vld [vmem:[%s616 + $0x20] sm:$0xff]
    %v622 = vld [vmem:[%s616 + $0x28] sm:$0xff]
    %v623 = vld [vmem:[%s616 + $0x30] sm:$0xff]
    %v624 = vld [vmem:[%s616 + $0x38] sm:$0xff]
    %v626 = vsel %vm95, %v617, 0
    %v629 = vsel %vm95, %v618, 0
    %v632 = vsel %vm95, %v619, 0
    %v635 = vsel %vm95, %v620, 0
    %v638 = vsel %vm95, %v621, 0
    %v641 = vsel %vm95, %v622, 0
    %v644 = vsel %vm95, %v623, 0
    %v647 = vsel %vm95, %v624, 0
    %649 = vmatprep.subr.mxu0 0.0
    %650 = vmatpush1.msra.mxu0 0.0
    %651 = vmatprep.subr.mxu0 0.0
    %652 = vmatpush1.msra.mxu0 0.0
    %653 = vmatprep.subr.mxu0 0.0
    %654 = vmatpush1.msra.mxu0 0.0
    %655 = vmatprep.subr.mxu0 0.0
    %656 = vmatpush1.msra.mxu0 0.0
    %657 = vmatprep.subr.mxu0 0.0
    %658 = vmatpush1.msra.mxu0 0.0
    %659 = vmatprep.subr.mxu0 0.0
    %660 = vmatpush1.msra.mxu0 0.0
    %661 = vmatprep.subr.mxu0 0.0
    %662 = vmatpush1.msra.mxu0 0.0
    %663 = vmatprep.subr.mxu0 0.0
    %664 = vmatpush1.msra.mxu0 0.0
    %665 = vmatprep.subr.mxu0 0.0
    %666 = vmatpush1.msra.mxu0 0.0
    %667 = vmatprep.subr.mxu0 0.0
    %668 = vmatpush1.msra.mxu0 0.0
    %669 = vmatprep.subr.mxu0 0.0
    %670 = vmatpush1.msra.mxu0 0.0
    %671 = vmatprep.subr.mxu0 0.0
    %672 = vmatpush1.msra.mxu0 0.0
    %673 = vmatprep.subr.mxu0 0.0
    %674 = vmatpush1.msra.mxu0 %v38
    %675 = vmatprep.subr.mxu0 0.0
    %676 = vmatpush1.msra.mxu0 %v37
    %677 = vmatprep.subr.mxu0 0.0
    %678 = vmatpush1.msra.mxu0 %v36
    %679 = vmatprep.subr.mxu0 0.0
    %680 = vmatpush1.msra.mxu0 %v35
    %681 = vmatprep.subr.mxu0 0.0
    %682 = vmatpush2.msra.mxu0 0.0
    %683 = vmatprep.subr.mxu0 0.0
    %684 = vmatpush2.msra.mxu0 0.0
    %685 = vmatprep.subr.mxu0 0.0
    %686 = vmatpush2.msra.mxu0 0.0
    %687 = vmatprep.subr.mxu0 0.0
    %688 = vmatpush2.msra.mxu0 0.0
    %689 = vmatprep.subr.mxu0 0.0
    %690 = vmatpush2.msra.mxu0 0.0
    %691 = vmatprep.subr.mxu0 0.0
    %692 = vmatpush2.msra.mxu0 0.0
    %693 = vmatprep.subr.mxu0 0.0
    %694 = vmatpush2.msra.mxu0 0.0
    %695 = vmatprep.subr.mxu0 0.0
    %696 = vmatpush2.msra.mxu0 0.0
    %697 = vmatprep.subr.mxu0 0.0
    %698 = vmatpush2.msra.mxu0 0.0
    %699 = vmatprep.subr.mxu0 0.0
    %700 = vmatpush2.msra.mxu0 0.0
    %701 = vmatprep.subr.mxu0 0.0
    %702 = vmatpush2.msra.mxu0 0.0
    %703 = vmatprep.subr.mxu0 0.0
    %704 = vmatpush2.msra.mxu0 0.0
    %705 = vmatprep.subr.mxu0 0.0
    %706 = vmatpush2.msra.mxu0 0.0
    %707 = vmatprep.subr.mxu0 0.0
    %708 = vmatpush2.msra.mxu0 0.0
    %709 = vmatprep.subr.mxu0 0.0
    %710 = vmatpush2.msra.mxu0 0.0
    %711 = vmatprep.subr.mxu0 0.0
    %712 = vmatpush2.msra.mxu0 0.0
    %713 = vmatprep.mubr.f32.mxu0 0.0
    %714 = vmatmul.mubr.f32.gmra.mxu0 %v626
    %v715 = vpop.f32.mrf.mxu0
    %v716 = vadd.f32 %v66, %v715
    %v717 = vpop.f32.mrf.mxu0
    %718 = vmatprep.mubr.f32.mxu0 0.0
    %719 = vmatmul.mubr.f32.gmra.mxu0 %v629
    %v720 = vpop.f32.mrf.mxu0
    %v721 = vadd.f32 %v66, %v720
    %v722 = vpop.f32.mrf.mxu0
    %723 = vmatprep.mubr.f32.mxu0 0.0
    %724 = vmatmul.mubr.f32.gmra.mxu0 %v632
    %v725 = vpop.f32.mrf.mxu0
    %v726 = vadd.f32 %v66, %v725
    %v727 = vpop.f32.mrf.mxu0
    %728 = vmatprep.mubr.f32.mxu0 0.0
    %729 = vmatmul.mubr.f32.gmra.mxu0 %v635
    %v730 = vpop.f32.mrf.mxu0
    %v731 = vadd.f32 %v66, %v730
    %v732 = vpop.f32.mrf.mxu0
    %733 = vmatprep.mubr.f32.mxu0 0.0
    %734 = vmatmul.mubr.f32.gmra.mxu0 %v638
    %v735 = vpop.f32.mrf.mxu0
    %v736 = vadd.f32 %v66, %v735
    %v737 = vpop.f32.mrf.mxu0
    %738 = vmatprep.mubr.f32.mxu0 0.0
    %739 = vmatmul.mubr.f32.gmra.mxu0 %v641
    %v740 = vpop.f32.mrf.mxu0
    %v741 = vadd.f32 %v66, %v740
    %v742 = vpop.f32.mrf.mxu0
    %743 = vmatprep.mubr.f32.mxu0 0.0
    %744 = vmatmul.mubr.f32.gmra.mxu0 %v644
    %v745 = vpop.f32.mrf.mxu0
    %v746 = vadd.f32 %v66, %v745
    %v747 = vpop.f32.mrf.mxu0
    %748 = vmatprep.mubr.f32.mxu0 0.0
    %749 = vmatmul.mubr.f32.gmra.mxu0 %v647
    %v750 = vpop.f32.mrf.mxu0
    %v751 = vadd.f32 %v66, %v750
    %v752 = vpop.f32.mrf.mxu0
    %753 = vdwg.mxu0
    %v754 = vxor.u32 %v716, 2147483648
    %v755 = vxor.u32 %v721, 2147483648
    %v756 = vxor.u32 %v726, 2147483648
    %v757 = vxor.u32 %v731, 2147483648
    %v758 = vxor.u32 %v736, 2147483648
    %v759 = vxor.u32 %v741, 2147483648
    %v760 = vxor.u32 %v746, 2147483648
    %v761 = vxor.u32 %v751, 2147483648
    %v762 = vmul.f32 %v754, 1.442695
    %v763 = vpow.pop %v762
    %v764 = vmul.f32 %v755, 1.442695
    %v765 = vpow.pop %v764
    %v766 = vmul.f32 %v756, 1.442695
    %v767 = vpow.pop %v766
    %v768 = vmul.f32 %v757, 1.442695
    %v769 = vpow.pop %v768
    %v770 = vmul.f32 %v758, 1.442695
    %v771 = vpow.pop %v770
    %v772 = vmul.f32 %v759, 1.442695
    %v773 = vpow.pop %v772
    %v774 = vmul.f32 %v760, 1.442695
    %v775 = vpow.pop %v774
    %v776 = vmul.f32 %v761, 1.442695
    %v777 = vpow.pop %v776
    %v778 = vadd.f32 %v763, 1.0
    %v779 = vadd.f32 %v765, 1.0
    %v780 = vadd.f32 %v767, 1.0
    %v781 = vadd.f32 %v769, 1.0
    %v782 = vadd.f32 %v771, 1.0
    %v783 = vadd.f32 %v773, 1.0
    %v784 = vadd.f32 %v775, 1.0
    %v785 = vadd.f32 %v777, 1.0
    %v786 = vrcp.pop %v778
    %v787 = vmul.f32 1.0, %v786
    %v788 = vrcp.pop %v779
    %v789 = vmul.f32 1.0, %v788
    %v790 = vrcp.pop %v780
    %v791 = vmul.f32 1.0, %v790
    %v792 = vrcp.pop %v781
    %v793 = vmul.f32 1.0, %v792
    %v794 = vrcp.pop %v782
    %v795 = vmul.f32 1.0, %v794
    %v796 = vrcp.pop %v783
    %v797 = vmul.f32 1.0, %v796
    %v798 = vrcp.pop %v784
    %v799 = vmul.f32 1.0, %v798
    %v800 = vrcp.pop %v785
    %v801 = vmul.f32 1.0, %v800
    %v802 = vmul.f32 %v716, %v787
    %v803 = vmul.f32 %v721, %v789
    %v804 = vmul.f32 %v726, %v791
    %v805 = vmul.f32 %v731, %v793
    %v806 = vmul.f32 %v736, %v795
    %v807 = vmul.f32 %v741, %v797
    %v808 = vmul.f32 %v746, %v799
    %v809 = vmul.f32 %v751, %v801
    %v811 = vsel %vm281, %v802, 0
    %v814 = vsel %vm281, %v803, 0
    %v817 = vsel %vm281, %v804, 0
    %v820 = vsel %vm281, %v805, 0
    %v823 = vsel %vm281, %v806, 0
    %v826 = vsel %vm281, %v807, 0
    %v829 = vsel %vm281, %v808, 0
    %v832 = vsel %vm281, %v809, 0
    %834 = vmatprep.subr.mxu0 0.0
    %835 = vmatpush1.msra.mxu0 0.0
    %836 = vmatprep.subr.mxu0 0.0
    %837 = vmatpush1.msra.mxu0 0.0
    %838 = vmatprep.subr.mxu0 0.0
    %839 = vmatpush1.msra.mxu0 0.0
    %840 = vmatprep.subr.mxu0 0.0
    %841 = vmatpush1.msra.mxu0 0.0
    %842 = vmatprep.subr.mxu0 0.0
    %843 = vmatpush1.msra.mxu0 0.0
    %844 = vmatprep.subr.mxu0 0.0
    %845 = vmatpush1.msra.mxu0 0.0
    %846 = vmatprep.subr.mxu0 0.0
    %847 = vmatpush1.msra.mxu0 0.0
    %848 = vmatprep.subr.mxu0 0.0
    %849 = vmatpush1.msra.mxu0 0.0
    %850 = vmatprep.subr.mxu0 0.0
    %851 = vmatpush1.msra.mxu0 0.0
    %852 = vmatprep.subr.mxu0 0.0
    %853 = vmatpush1.msra.mxu0 0.0
    %854 = vmatprep.subr.mxu0 0.0
    %855 = vmatpush1.msra.mxu0 0.0
    %856 = vmatprep.subr.mxu0 0.0
    %857 = vmatpush1.msra.mxu0 0.0
    %858 = vmatprep.subr.mxu0 0.0
    %859 = vmatpush1.msra.mxu0 0.0
    %860 = vmatprep.subr.mxu0 0.0
    %861 = vmatpush1.msra.mxu0 0.0
    %862 = vmatprep.subr.mxu0 0.0
    %863 = vmatpush1.msra.mxu0 %v40
    %864 = vmatprep.subr.mxu0 0.0
    %865 = vmatpush1.msra.mxu0 %v39
    %866 = vmatprep.subr.mxu0 0.0
    %867 = vmatpush2.msra.mxu0 0.0
    %868 = vmatprep.subr.mxu0 0.0
    %869 = vmatpush2.msra.mxu0 0.0
    %870 = vmatprep.subr.mxu0 0.0
    %871 = vmatpush2.msra.mxu0 0.0
    %872 = vmatprep.subr.mxu0 0.0
    %873 = vmatpush2.msra.mxu0 0.0
    %874 = vmatprep.subr.mxu0 0.0
    %875 = vmatpush2.msra.mxu0 0.0
    %876 = vmatprep.subr.mxu0 0.0
    %877 = vmatpush2.msra.mxu0 0.0
    %878 = vmatprep.subr.mxu0 0.0
    %879 = vmatpush2.msra.mxu0 0.0
    %880 = vmatprep.subr.mxu0 0.0
    %881 = vmatpush2.msra.mxu0 0.0
    %882 = vmatprep.subr.mxu0 0.0
    %883 = vmatpush2.msra.mxu0 0.0
    %884 = vmatprep.subr.mxu0 0.0
    %885 = vmatpush2.msra.mxu0 0.0
    %886 = vmatprep.subr.mxu0 0.0
    %887 = vmatpush2.msra.mxu0 0.0
    %888 = vmatprep.subr.mxu0 0.0
    %889 = vmatpush2.msra.mxu0 0.0
    %890 = vmatprep.subr.mxu0 0.0
    %891 = vmatpush2.msra.mxu0 0.0
    %892 = vmatprep.subr.mxu0 0.0
    %893 = vmatpush2.msra.mxu0 0.0
    %894 = vmatprep.subr.mxu0 0.0
    %895 = vmatpush2.msra.mxu0 0.0
    %896 = vmatprep.subr.mxu0 0.0
    %897 = vmatpush2.msra.mxu0 0.0
    %898 = vmatprep.mubr.f32.mxu0 0.0
    %899 = vmatmul.mubr.f32.gmra.mxu0 %v811
    %v900 = vpop.f32.mrf.mxu0
    %v901 = vadd.f32 %v73, %v900
    %v902 = vpop.f32.mrf.mxu0
    %903 = vmatprep.mubr.f32.mxu0 0.0
    %904 = vmatmul.mubr.f32.gmra.mxu0 %v814
    %v905 = vpop.f32.mrf.mxu0
    %v906 = vadd.f32 %v73, %v905
    %v907 = vpop.f32.mrf.mxu0
    %908 = vmatprep.mubr.f32.mxu0 0.0
    %909 = vmatmul.mubr.f32.gmra.mxu0 %v817
    %v910 = vpop.f32.mrf.mxu0
    %v911 = vadd.f32 %v73, %v910
    %v912 = vpop.f32.mrf.mxu0
    %913 = vmatprep.mubr.f32.mxu0 0.0
    %914 = vmatmul.mubr.f32.gmra.mxu0 %v820
    %v915 = vpop.f32.mrf.mxu0
    %v916 = vadd.f32 %v73, %v915
    %v917 = vpop.f32.mrf.mxu0
    %918 = vmatprep.mubr.f32.mxu0 0.0
    %919 = vmatmul.mubr.f32.gmra.mxu0 %v823
    %v920 = vpop.f32.mrf.mxu0
    %v921 = vadd.f32 %v73, %v920
    %v922 = vpop.f32.mrf.mxu0
    %923 = vmatprep.mubr.f32.mxu0 0.0
    %924 = vmatmul.mubr.f32.gmra.mxu0 %v826
    %v925 = vpop.f32.mrf.mxu0
    %v926 = vadd.f32 %v73, %v925
    %v927 = vpop.f32.mrf.mxu0
    %928 = vmatprep.mubr.f32.mxu0 0.0
    %929 = vmatmul.mubr.f32.gmra.mxu0 %v829
    %v930 = vpop.f32.mrf.mxu0
    %v931 = vadd.f32 %v73, %v930
    %v932 = vpop.f32.mrf.mxu0
    %933 = vmatprep.mubr.f32.mxu0 0.0
    %934 = vmatmul.mubr.f32.gmra.mxu0 %v832
    %v935 = vpop.f32.mrf.mxu0
    %v936 = vadd.f32 %v73, %v935
    %v937 = vpop.f32.mrf.mxu0
    %938 = vdwg.mxu0
    %v939 = vxor.u32 %v901, 2147483648
    %v940 = vxor.u32 %v906, 2147483648
    %v941 = vxor.u32 %v911, 2147483648
    %v942 = vxor.u32 %v916, 2147483648
    %v943 = vxor.u32 %v921, 2147483648
    %v944 = vxor.u32 %v926, 2147483648
    %v945 = vxor.u32 %v931, 2147483648
    %v946 = vxor.u32 %v936, 2147483648
    %v947 = vmul.f32 %v939, 1.442695
    %v948 = vpow.pop %v947
    %v949 = vmul.f32 %v940, 1.442695
    %v950 = vpow.pop %v949
    %v951 = vmul.f32 %v941, 1.442695
    %v952 = vpow.pop %v951
    %v953 = vmul.f32 %v942, 1.442695
    %v954 = vpow.pop %v953
    %v955 = vmul.f32 %v943, 1.442695
    %v956 = vpow.pop %v955
    %v957 = vmul.f32 %v944, 1.442695
    %v958 = vpow.pop %v957
    %v959 = vmul.f32 %v945, 1.442695
    %v960 = vpow.pop %v959
    %v961 = vmul.f32 %v946, 1.442695
    %v962 = vpow.pop %v961
    %v963 = vadd.f32 %v948, 1.0
    %v964 = vadd.f32 %v950, 1.0
    %v965 = vadd.f32 %v952, 1.0
    %v966 = vadd.f32 %v954, 1.0
    %v967 = vadd.f32 %v956, 1.0
    %v968 = vadd.f32 %v958, 1.0
    %v969 = vadd.f32 %v960, 1.0
    %v970 = vadd.f32 %v962, 1.0
    %v971 = vrcp.pop %v963
    %v972 = vmul.f32 1.0, %v971
    %v973 = vrcp.pop %v964
    %v974 = vmul.f32 1.0, %v973
    %v975 = vrcp.pop %v965
    %v976 = vmul.f32 1.0, %v975
    %v977 = vrcp.pop %v966
    %v978 = vmul.f32 1.0, %v977
    %v979 = vrcp.pop %v967
    %v980 = vmul.f32 1.0, %v979
    %v981 = vrcp.pop %v968
    %v982 = vmul.f32 1.0, %v981
    %v983 = vrcp.pop %v969
    %v984 = vmul.f32 1.0, %v983
    %v985 = vrcp.pop %v970
    %v986 = vmul.f32 1.0, %v985
    %v987 = vmul.f32 %v901, %v972
    %v988 = vmul.f32 %v906, %v974
    %v989 = vmul.f32 %v911, %v976
    %v990 = vmul.f32 %v916, %v978
    %v991 = vmul.f32 %v921, %v980
    %v992 = vmul.f32 %v926, %v982
    %v993 = vmul.f32 %v931, %v984
    %v994 = vmul.f32 %v936, %v986
    %v996 = vsel %vm95, %v987, 0
    %v999 = vsel %vm95, %v988, 0
    %v1002 = vsel %vm95, %v989, 0
    %v1005 = vsel %vm95, %v990, 0
    %v1008 = vsel %vm95, %v991, 0
    %v1011 = vsel %vm95, %v992, 0
    %v1014 = vsel %vm95, %v993, 0
    %v1017 = vsel %vm95, %v994, 0
    %1019 = vmatprep.subr.mxu0 0.0
    %1020 = vmatpush1.msra.mxu0 0.0
    %1021 = vmatprep.subr.mxu0 0.0
    %1022 = vmatpush1.msra.mxu0 0.0
    %1023 = vmatprep.subr.mxu0 0.0
    %1024 = vmatpush1.msra.mxu0 0.0
    %1025 = vmatprep.subr.mxu0 0.0
    %1026 = vmatpush1.msra.mxu0 0.0
    %1027 = vmatprep.subr.mxu0 0.0
    %1028 = vmatpush1.msra.mxu0 0.0
    %1029 = vmatprep.subr.mxu0 0.0
    %1030 = vmatpush1.msra.mxu0 0.0
    %1031 = vmatprep.subr.mxu0 0.0
    %1032 = vmatpush1.msra.mxu0 0.0
    %1033 = vmatprep.subr.mxu0 0.0
    %1034 = vmatpush1.msra.mxu0 0.0
    %1035 = vmatprep.subr.mxu0 0.0
    %1036 = vmatpush1.msra.mxu0 0.0
    %1037 = vmatprep.subr.mxu0 0.0
    %1038 = vmatpush1.msra.mxu0 0.0
    %1039 = vmatprep.subr.mxu0 0.0
    %1040 = vmatpush1.msra.mxu0 0.0
    %1041 = vmatprep.subr.mxu0 0.0
    %1042 = vmatpush1.msra.mxu0 0.0
    %1043 = vmatprep.subr.mxu0 0.0
    %1044 = vmatpush1.msra.mxu0 %v44
    %1045 = vmatprep.subr.mxu0 0.0
    %1046 = vmatpush1.msra.mxu0 %v43
    %1047 = vmatprep.subr.mxu0 0.0
    %1048 = vmatpush1.msra.mxu0 %v42
    %1049 = vmatprep.subr.mxu0 0.0
    %1050 = vmatpush1.msra.mxu0 %v41
    %1051 = vmatprep.subr.mxu0 0.0
    %1052 = vmatpush2.msra.mxu0 0.0
    %1053 = vmatprep.subr.mxu0 0.0
    %1054 = vmatpush2.msra.mxu0 0.0
    %1055 = vmatprep.subr.mxu0 0.0
    %1056 = vmatpush2.msra.mxu0 0.0
    %1057 = vmatprep.subr.mxu0 0.0
    %1058 = vmatpush2.msra.mxu0 0.0
    %1059 = vmatprep.subr.mxu0 0.0
    %1060 = vmatpush2.msra.mxu0 0.0
    %1061 = vmatprep.subr.mxu0 0.0
    %1062 = vmatpush2.msra.mxu0 0.0
    %1063 = vmatprep.subr.mxu0 0.0
    %1064 = vmatpush2.msra.mxu0 0.0
    %1065 = vmatprep.subr.mxu0 0.0
    %1066 = vmatpush2.msra.mxu0 0.0
    %1067 = vmatprep.subr.mxu0 0.0
    %1068 = vmatpush2.msra.mxu0 0.0
    %1069 = vmatprep.subr.mxu0 0.0
    %1070 = vmatpush2.msra.mxu0 0.0
    %1071 = vmatprep.subr.mxu0 0.0
    %1072 = vmatpush2.msra.mxu0 0.0
    %1073 = vmatprep.subr.mxu0 0.0
    %1074 = vmatpush2.msra.mxu0 0.0
    %1075 = vmatprep.subr.mxu0 0.0
    %1076 = vmatpush2.msra.mxu0 0.0
    %1077 = vmatprep.subr.mxu0 0.0
    %1078 = vmatpush2.msra.mxu0 0.0
    %1079 = vmatprep.subr.mxu0 0.0
    %1080 = vmatpush2.msra.mxu0 0.0
    %1081 = vmatprep.subr.mxu0 0.0
    %1082 = vmatpush2.msra.mxu0 0.0
    %1083 = vmatprep.mubr.f32.mxu0 0.0
    %1084 = vmatmul.mubr.f32.gmra.mxu0 %v996
    %v1085 = vpop.f32.mrf.mxu0
    %v1086 = vadd.f32 %v80, %v1085
    %v1087 = vpop.f32.mrf.mxu0
    %1088 = vmatprep.mubr.f32.mxu0 0.0
    %1089 = vmatmul.mubr.f32.gmra.mxu0 %v999
    %v1090 = vpop.f32.mrf.mxu0
    %v1091 = vadd.f32 %v80, %v1090
    %v1092 = vpop.f32.mrf.mxu0
    %1093 = vmatprep.mubr.f32.mxu0 0.0
    %1094 = vmatmul.mubr.f32.gmra.mxu0 %v1002
    %v1095 = vpop.f32.mrf.mxu0
    %v1096 = vadd.f32 %v80, %v1095
    %v1097 = vpop.f32.mrf.mxu0
    %1098 = vmatprep.mubr.f32.mxu0 0.0
    %1099 = vmatmul.mubr.f32.gmra.mxu0 %v1005
    %v1100 = vpop.f32.mrf.mxu0
    %v1101 = vadd.f32 %v80, %v1100
    %v1102 = vpop.f32.mrf.mxu0
    %1103 = vmatprep.mubr.f32.mxu0 0.0
    %1104 = vmatmul.mubr.f32.gmra.mxu0 %v1008
    %v1105 = vpop.f32.mrf.mxu0
    %v1106 = vadd.f32 %v80, %v1105
    %v1107 = vpop.f32.mrf.mxu0
    %1108 = vmatprep.mubr.f32.mxu0 0.0
    %1109 = vmatmul.mubr.f32.gmra.mxu0 %v1011
    %v1110 = vpop.f32.mrf.mxu0
    %v1111 = vadd.f32 %v80, %v1110
    %v1112 = vpop.f32.mrf.mxu0
    %1113 = vmatprep.mubr.f32.mxu0 0.0
    %1114 = vmatmul.mubr.f32.gmra.mxu0 %v1014
    %v1115 = vpop.f32.mrf.mxu0
    %v1116 = vadd.f32 %v80, %v1115
    %v1117 = vpop.f32.mrf.mxu0
    %1118 = vmatprep.mubr.f32.mxu0 0.0
    %1119 = vmatmul.mubr.f32.gmra.mxu0 %v1017
    %v1120 = vpop.f32.mrf.mxu0
    %v1121 = vadd.f32 %v80, %v1120
    %v1122 = vpop.f32.mrf.mxu0
    %1123 = vdwg.mxu0
    %1124 = vmatprep.subr.mxu0 0.0
    %1125 = vmatpush1.msra.mxu0 %v60
    %1126 = vmatprep.subr.mxu0 0.0
    %1127 = vmatpush1.msra.mxu0 %v59
    %1128 = vmatprep.subr.mxu0 0.0
    %1129 = vmatpush1.msra.mxu0 %v58
    %1130 = vmatprep.subr.mxu0 0.0
    %1131 = vmatpush1.msra.mxu0 %v57
    %1132 = vmatprep.subr.mxu0 0.0
    %1133 = vmatpush1.msra.mxu0 %v56
    %1134 = vmatprep.subr.mxu0 0.0
    %1135 = vmatpush1.msra.mxu0 %v55
    %1136 = vmatprep.subr.mxu0 0.0
    %1137 = vmatpush1.msra.mxu0 %v54
    %1138 = vmatprep.subr.mxu0 0.0
    %1139 = vmatpush1.msra.mxu0 %v53
    %1140 = vmatprep.subr.mxu0 0.0
    %1141 = vmatpush1.msra.mxu0 %v52
    %1142 = vmatprep.subr.mxu0 0.0
    %1143 = vmatpush1.msra.mxu0 %v51
    %1144 = vmatprep.subr.mxu0 0.0
    %1145 = vmatpush1.msra.mxu0 %v50
    %1146 = vmatprep.subr.mxu0 0.0
    %1147 = vmatpush1.msra.mxu0 %v49
    %1148 = vmatprep.subr.mxu0 0.0
    %1149 = vmatpush1.msra.mxu0 %v48
    %1150 = vmatprep.subr.mxu0 0.0
    %1151 = vmatpush1.msra.mxu0 %v47
    %1152 = vmatprep.subr.mxu0 0.0
    %1153 = vmatpush1.msra.mxu0 %v46
    %1154 = vmatprep.subr.mxu0 0.0
    %1155 = vmatpush1.msra.mxu0 %v45
    %1156 = vmatprep.subr.mxu0 0.0
    %1157 = vmatpush2.msra.mxu0 0.0
    %1158 = vmatprep.subr.mxu0 0.0
    %1159 = vmatpush2.msra.mxu0 0.0
    %1160 = vmatprep.subr.mxu0 0.0
    %1161 = vmatpush2.msra.mxu0 0.0
    %1162 = vmatprep.subr.mxu0 0.0
    %1163 = vmatpush2.msra.mxu0 0.0
    %1164 = vmatprep.subr.mxu0 0.0
    %1165 = vmatpush2.msra.mxu0 0.0
    %1166 = vmatprep.subr.mxu0 0.0
    %1167 = vmatpush2.msra.mxu0 0.0
    %1168 = vmatprep.subr.mxu0 0.0
    %1169 = vmatpush2.msra.mxu0 0.0
    %1170 = vmatprep.subr.mxu0 0.0
    %1171 = vmatpush2.msra.mxu0 0.0
    %1172 = vmatprep.subr.mxu0 0.0
    %1173 = vmatpush2.msra.mxu0 0.0
    %1174 = vmatprep.subr.mxu0 0.0
    %1175 = vmatpush2.msra.mxu0 0.0
    %1176 = vmatprep.subr.mxu0 0.0
    %1177 = vmatpush2.msra.mxu0 0.0
    %1178 = vmatprep.subr.mxu0 0.0
    %1179 = vmatpush2.msra.mxu0 0.0
    %1180 = vmatprep.subr.mxu0 0.0
    %1181 = vmatpush2.msra.mxu0 0.0
    %1182 = vmatprep.subr.mxu0 0.0
    %1183 = vmatpush2.msra.mxu0 0.0
    %1184 = vmatprep.subr.mxu0 0.0
    %1185 = vmatpush2.msra.mxu0 0.0
    %1186 = vmatprep.subr.mxu0 0.0
    %1187 = vmatpush2.msra.mxu0 0.0
    %1188 = vmatprep.mubr.f32.mxu0 0.0
    %1189 = vmatmul.mubr.f32.gmra.mxu0 %v602
    %v1190 = vpop.f32.mrf.mxu0
    %v1191 = vadd.f32 0.0, %v1190
    %v1192 = vpop.f32.mrf.mxu0
    %1193 = vdwg.mxu0
    %v1194 = vadd.f32 %v604, %v1191
    %v1195 = vtanh.pop %v1194
    %v1196 = vxor.u32 %v1194, 2147483648
    %v1197 = vmul.f32 %v1196, 1.442695
    %v1198 = vpow.pop %v1197
    %v1199 = vadd.f32 %v1198, 1.0
    %v1200 = vrcp.pop %v1199
    %v1201 = vmul.f32 1.0, %v1200
    %v1202 = vsel %vm86, %v1195, %v1201
    %1203 = vrot.lane.b32.xlu0 %v1202, 96
    %v1204 = vpop.permute.xlu0 %1203
    %1205 = vrot.lane.b32.xlu0 %v1202, 64
    %v1206 = vpop.permute.xlu0 %1205
    %1207 = vrot.lane.b32.xlu0 %v1202, 32
    %v1208 = vpop.permute.xlu0 %1207
    %v1209 = vmul.f32 %v1204, %v603
    %v1210 = vmul.f32 %v1202, %v1206
    %v1211 = vadd.f32 %v1209, %v1210
    %v1212 = vtanh.pop %v1211
    %v1213 = vmul.f32 %v1208, %v1212
    %1214 = vmatprep.subr.mxu0 0.0
    %1215 = vmatpush1.msra.mxu0 %v60
    %1216 = vmatprep.subr.mxu0 0.0
    %1217 = vmatpush1.msra.mxu0 %v59
    %1218 = vmatprep.subr.mxu0 0.0
    %1219 = vmatpush1.msra.mxu0 %v58
    %1220 = vmatprep.subr.mxu0 0.0
    %1221 = vmatpush1.msra.mxu0 %v57
    %1222 = vmatprep.subr.mxu0 0.0
    %1223 = vmatpush1.msra.mxu0 %v56
    %1224 = vmatprep.subr.mxu0 0.0
    %1225 = vmatpush1.msra.mxu0 %v55
    %1226 = vmatprep.subr.mxu0 0.0
    %1227 = vmatpush1.msra.mxu0 %v54
    %1228 = vmatprep.subr.mxu0 0.0
    %1229 = vmatpush1.msra.mxu0 %v53
    %1230 = vmatprep.subr.mxu0 0.0
    %1231 = vmatpush1.msra.mxu0 %v52
    %1232 = vmatprep.subr.mxu0 0.0
    %1233 = vmatpush1.msra.mxu0 %v51
    %1234 = vmatprep.subr.mxu0 0.0
    %1235 = vmatpush1.msra.mxu0 %v50
    %1236 = vmatprep.subr.mxu0 0.0
    %1237 = vmatpush1.msra.mxu0 %v49
    %1238 = vmatprep.subr.mxu0 0.0
    %1239 = vmatpush1.msra.mxu0 %v48
    %1240 = vmatprep.subr.mxu0 0.0
    %1241 = vmatpush1.msra.mxu0 %v47
    %1242 = vmatprep.subr.mxu0 0.0
    %1243 = vmatpush1.msra.mxu0 %v46
    %1244 = vmatprep.subr.mxu0 0.0
    %1245 = vmatpush1.msra.mxu0 %v45
    %1246 = vmatprep.subr.mxu0 0.0
    %1247 = vmatpush2.msra.mxu0 0.0
    %1248 = vmatprep.subr.mxu0 0.0
    %1249 = vmatpush2.msra.mxu0 0.0
    %1250 = vmatprep.subr.mxu0 0.0
    %1251 = vmatpush2.msra.mxu0 0.0
    %1252 = vmatprep.subr.mxu0 0.0
    %1253 = vmatpush2.msra.mxu0 0.0
    %1254 = vmatprep.subr.mxu0 0.0
    %1255 = vmatpush2.msra.mxu0 0.0
    %1256 = vmatprep.subr.mxu0 0.0
    %1257 = vmatpush2.msra.mxu0 0.0
    %1258 = vmatprep.subr.mxu0 0.0
    %1259 = vmatpush2.msra.mxu0 0.0
    %1260 = vmatprep.subr.mxu0 0.0
    %1261 = vmatpush2.msra.mxu0 0.0
    %1262 = vmatprep.subr.mxu0 0.0
    %1263 = vmatpush2.msra.mxu0 0.0
    %1264 = vmatprep.subr.mxu0 0.0
    %1265 = vmatpush2.msra.mxu0 0.0
    %1266 = vmatprep.subr.mxu0 0.0
    %1267 = vmatpush2.msra.mxu0 0.0
    %1268 = vmatprep.subr.mxu0 0.0
    %1269 = vmatpush2.msra.mxu0 0.0
    %1270 = vmatprep.subr.mxu0 0.0
    %1271 = vmatpush2.msra.mxu0 0.0
    %1272 = vmatprep.subr.mxu0 0.0
    %1273 = vmatpush2.msra.mxu0 0.0
    %1274 = vmatprep.subr.mxu0 0.0
    %1275 = vmatpush2.msra.mxu0 0.0
    %1276 = vmatprep.subr.mxu0 0.0
    %1277 = vmatpush2.msra.mxu0 0.0
    %1278 = vmatprep.mubr.f32.mxu0 0.0
    %1279 = vmatmul.mubr.f32.gmra.mxu0 %v1213
    %v1280 = vpop.f32.mrf.mxu0
    %v1281 = vadd.f32 0.0, %v1280
    %v1282 = vpop.f32.mrf.mxu0
    %1283 = vdwg.mxu0
    %v1284 = vadd.f32 %v605, %v1281
    %v1285 = vtanh.pop %v1284
    %v1286 = vxor.u32 %v1284, 2147483648
    %v1287 = vmul.f32 %v1286, 1.442695
    %v1288 = vpow.pop %v1287
    %v1289 = vadd.f32 %v1288, 1.0
    %v1290 = vrcp.pop %v1289
    %v1291 = vmul.f32 1.0, %v1290
    %v1292 = vsel %vm86, %v1285, %v1291
    %1293 = vrot.lane.b32.xlu0 %v1292, 96
    %v1294 = vpop.permute.xlu0 %1293
    %1295 = vrot.lane.b32.xlu0 %v1292, 64
    %v1296 = vpop.permute.xlu0 %1295
    %1297 = vrot.lane.b32.xlu0 %v1292, 32
    %v1298 = vpop.permute.xlu0 %1297
    %v1299 = vmul.f32 %v1294, %v1211
    %v1300 = vmul.f32 %v1292, %v1296
    %v1301 = vadd.f32 %v1299, %v1300
    %v1302 = vtanh.pop %v1301
    %v1303 = vmul.f32 %v1298, %v1302
    %1304 = vmatprep.subr.mxu0 0.0
    %1305 = vmatpush1.msra.mxu0 %v60
    %1306 = vmatprep.subr.mxu0 0.0
    %1307 = vmatpush1.msra.mxu0 %v59
    %1308 = vmatprep.subr.mxu0 0.0
    %1309 = vmatpush1.msra.mxu0 %v58
    %1310 = vmatprep.subr.mxu0 0.0
    %1311 = vmatpush1.msra.mxu0 %v57
    %1312 = vmatprep.subr.mxu0 0.0
    %1313 = vmatpush1.msra.mxu0 %v56
    %1314 = vmatprep.subr.mxu0 0.0
    %1315 = vmatpush1.msra.mxu0 %v55
    %1316 = vmatprep.subr.mxu0 0.0
    %1317 = vmatpush1.msra.mxu0 %v54
    %1318 = vmatprep.subr.mxu0 0.0
    %1319 = vmatpush1.msra.mxu0 %v53
    %1320 = vmatprep.subr.mxu0 0.0
    %1321 = vmatpush1.msra.mxu0 %v52
    %1322 = vmatprep.subr.mxu0 0.0
    %1323 = vmatpush1.msra.mxu0 %v51
    %1324 = vmatprep.subr.mxu0 0.0
    %1325 = vmatpush1.msra.mxu0 %v50
    %1326 = vmatprep.subr.mxu0 0.0
    %1327 = vmatpush1.msra.mxu0 %v49
    %1328 = vmatprep.subr.mxu0 0.0
    %1329 = vmatpush1.msra.mxu0 %v48
    %1330 = vmatprep.subr.mxu0 0.0
    %1331 = vmatpush1.msra.mxu0 %v47
    %1332 = vmatprep.subr.mxu0 0.0
    %1333 = vmatpush1.msra.mxu0 %v46
    %1334 = vmatprep.subr.mxu0 0.0
    %1335 = vmatpush1.msra.mxu0 %v45
    %1336 = vmatprep.subr.mxu0 0.0
    %1337 = vmatpush2.msra.mxu0 0.0
    %1338 = vmatprep.subr.mxu0 0.0
    %1339 = vmatpush2.msra.mxu0 0.0
    %1340 = vmatprep.subr.mxu0 0.0
    %1341 = vmatpush2.msra.mxu0 0.0
    %1342 = vmatprep.subr.mxu0 0.0
    %1343 = vmatpush2.msra.mxu0 0.0
    %1344 = vmatprep.subr.mxu0 0.0
    %1345 = vmatpush2.msra.mxu0 0.0
    %1346 = vmatprep.subr.mxu0 0.0
    %1347 = vmatpush2.msra.mxu0 0.0
    %1348 = vmatprep.subr.mxu0 0.0
    %1349 = vmatpush2.msra.mxu0 0.0
    %1350 = vmatprep.subr.mxu0 0.0
    %1351 = vmatpush2.msra.mxu0 0.0
    %1352 = vmatprep.subr.mxu0 0.0
    %1353 = vmatpush2.msra.mxu0 0.0
    %1354 = vmatprep.subr.mxu0 0.0
    %1355 = vmatpush2.msra.mxu0 0.0
    %1356 = vmatprep.subr.mxu0 0.0
    %1357 = vmatpush2.msra.mxu0 0.0
    %1358 = vmatprep.subr.mxu0 0.0
    %1359 = vmatpush2.msra.mxu0 0.0
    %1360 = vmatprep.subr.mxu0 0.0
    %1361 = vmatpush2.msra.mxu0 0.0
    %1362 = vmatprep.subr.mxu0 0.0
    %1363 = vmatpush2.msra.mxu0 0.0
    %1364 = vmatprep.subr.mxu0 0.0
    %1365 = vmatpush2.msra.mxu0 0.0
    %1366 = vmatprep.subr.mxu0 0.0
    %1367 = vmatpush2.msra.mxu0 0.0
    %1368 = vmatprep.mubr.f32.mxu0 0.0
    %1369 = vmatmul.mubr.f32.gmra.mxu0 %v1303
    %v1370 = vpop.f32.mrf.mxu0
    %v1371 = vadd.f32 0.0, %v1370
    %v1372 = vpop.f32.mrf.mxu0
    %1373 = vdwg.mxu0
    %v1374 = vadd.f32 %v606, %v1371
    %v1375 = vtanh.pop %v1374
    %v1376 = vxor.u32 %v1374, 2147483648
    %v1377 = vmul.f32 %v1376, 1.442695
    %v1378 = vpow.pop %v1377
    %v1379 = vadd.f32 %v1378, 1.0
    %v1380 = vrcp.pop %v1379
    %v1381 = vmul.f32 1.0, %v1380
    %v1382 = vsel %vm86, %v1375, %v1381
    %1383 = vrot.lane.b32.xlu0 %v1382, 96
    %v1384 = vpop.permute.xlu0 %1383
    %1385 = vrot.lane.b32.xlu0 %v1382, 64
    %v1386 = vpop.permute.xlu0 %1385
    %1387 = vrot.lane.b32.xlu0 %v1382, 32
    %v1388 = vpop.permute.xlu0 %1387
    %v1389 = vmul.f32 %v1384, %v1301
    %v1390 = vmul.f32 %v1382, %v1386
    %v1391 = vadd.f32 %v1389, %v1390
    %v1392 = vtanh.pop %v1391
    %v1393 = vmul.f32 %v1388, %v1392
    %1394 = vmatprep.subr.mxu0 0.0
    %1395 = vmatpush1.msra.mxu0 %v60
    %1396 = vmatprep.subr.mxu0 0.0
    %1397 = vmatpush1.msra.mxu0 %v59
    %1398 = vmatprep.subr.mxu0 0.0
    %1399 = vmatpush1.msra.mxu0 %v58
    %1400 = vmatprep.subr.mxu0 0.0
    %1401 = vmatpush1.msra.mxu0 %v57
    %1402 = vmatprep.subr.mxu0 0.0
    %1403 = vmatpush1.msra.mxu0 %v56
    %1404 = vmatprep.subr.mxu0 0.0
    %1405 = vmatpush1.msra.mxu0 %v55
    %1406 = vmatprep.subr.mxu0 0.0
    %1407 = vmatpush1.msra.mxu0 %v54
    %1408 = vmatprep.subr.mxu0 0.0
    %1409 = vmatpush1.msra.mxu0 %v53
    %1410 = vmatprep.subr.mxu0 0.0
    %1411 = vmatpush1.msra.mxu0 %v52
    %1412 = vmatprep.subr.mxu0 0.0
    %1413 = vmatpush1.msra.mxu0 %v51
    %1414 = vmatprep.subr.mxu0 0.0
    %1415 = vmatpush1.msra.mxu0 %v50
    %1416 = vmatprep.subr.mxu0 0.0
    %1417 = vmatpush1.msra.mxu0 %v49
    %1418 = vmatprep.subr.mxu0 0.0
    %1419 = vmatpush1.msra.mxu0 %v48
    %1420 = vmatprep.subr.mxu0 0.0
    %1421 = vmatpush1.msra.mxu0 %v47
    %1422 = vmatprep.subr.mxu0 0.0
    %1423 = vmatpush1.msra.mxu0 %v46
    %1424 = vmatprep.subr.mxu0 0.0
    %1425 = vmatpush1.msra.mxu0 %v45
    %1426 = vmatprep.subr.mxu0 0.0
    %1427 = vmatpush2.msra.mxu0 0.0
    %1428 = vmatprep.subr.mxu0 0.0
    %1429 = vmatpush2.msra.mxu0 0.0
    %1430 = vmatprep.subr.mxu0 0.0
    %1431 = vmatpush2.msra.mxu0 0.0
    %1432 = vmatprep.subr.mxu0 0.0
    %1433 = vmatpush2.msra.mxu0 0.0
    %1434 = vmatprep.subr.mxu0 0.0
    %1435 = vmatpush2.msra.mxu0 0.0
    %1436 = vmatprep.subr.mxu0 0.0
    %1437 = vmatpush2.msra.mxu0 0.0
    %1438 = vmatprep.subr.mxu0 0.0
    %1439 = vmatpush2.msra.mxu0 0.0
    %1440 = vmatprep.subr.mxu0 0.0
    %1441 = vmatpush2.msra.mxu0 0.0
    %1442 = vmatprep.subr.mxu0 0.0
    %1443 = vmatpush2.msra.mxu0 0.0
    %1444 = vmatprep.subr.mxu0 0.0
    %1445 = vmatpush2.msra.mxu0 0.0
    %1446 = vmatprep.subr.mxu0 0.0
    %1447 = vmatpush2.msra.mxu0 0.0
    %1448 = vmatprep.subr.mxu0 0.0
    %1449 = vmatpush2.msra.mxu0 0.0
    %1450 = vmatprep.subr.mxu0 0.0
    %1451 = vmatpush2.msra.mxu0 0.0
    %1452 = vmatprep.subr.mxu0 0.0
    %1453 = vmatpush2.msra.mxu0 0.0
    %1454 = vmatprep.subr.mxu0 0.0
    %1455 = vmatpush2.msra.mxu0 0.0
    %1456 = vmatprep.subr.mxu0 0.0
    %1457 = vmatpush2.msra.mxu0 0.0
    %1458 = vmatprep.mubr.f32.mxu0 0.0
    %1459 = vmatmul.mubr.f32.gmra.mxu0 %v1393
    %v1460 = vpop.f32.mrf.mxu0
    %v1461 = vadd.f32 0.0, %v1460
    %v1462 = vpop.f32.mrf.mxu0
    %1463 = vdwg.mxu0
    %v1464 = vadd.f32 %v607, %v1461
    %v1465 = vtanh.pop %v1464
    %v1466 = vxor.u32 %v1464, 2147483648
    %v1467 = vmul.f32 %v1466, 1.442695
    %v1468 = vpow.pop %v1467
    %v1469 = vadd.f32 %v1468, 1.0
    %v1470 = vrcp.pop %v1469
    %v1471 = vmul.f32 1.0, %v1470
    %v1472 = vsel %vm86, %v1465, %v1471
    %1473 = vrot.lane.b32.xlu0 %v1472, 96
    %v1474 = vpop.permute.xlu0 %1473
    %1475 = vrot.lane.b32.xlu0 %v1472, 64
    %v1476 = vpop.permute.xlu0 %1475
    %1477 = vrot.lane.b32.xlu0 %v1472, 32
    %v1478 = vpop.permute.xlu0 %1477
    %v1479 = vmul.f32 %v1474, %v1391
    %v1480 = vmul.f32 %v1472, %v1476
    %v1481 = vadd.f32 %v1479, %v1480
    %v1482 = vtanh.pop %v1481
    %v1483 = vmul.f32 %v1478, %v1482
    %1484 = vmatprep.subr.mxu0 0.0
    %1485 = vmatpush1.msra.mxu0 %v60
    %1486 = vmatprep.subr.mxu0 0.0
    %1487 = vmatpush1.msra.mxu0 %v59
    %1488 = vmatprep.subr.mxu0 0.0
    %1489 = vmatpush1.msra.mxu0 %v58
    %1490 = vmatprep.subr.mxu0 0.0
    %1491 = vmatpush1.msra.mxu0 %v57
    %1492 = vmatprep.subr.mxu0 0.0
    %1493 = vmatpush1.msra.mxu0 %v56
    %1494 = vmatprep.subr.mxu0 0.0
    %1495 = vmatpush1.msra.mxu0 %v55
    %1496 = vmatprep.subr.mxu0 0.0
    %1497 = vmatpush1.msra.mxu0 %v54
    %1498 = vmatprep.subr.mxu0 0.0
    %1499 = vmatpush1.msra.mxu0 %v53
    %1500 = vmatprep.subr.mxu0 0.0
    %1501 = vmatpush1.msra.mxu0 %v52
    %1502 = vmatprep.subr.mxu0 0.0
    %1503 = vmatpush1.msra.mxu0 %v51
    %1504 = vmatprep.subr.mxu0 0.0
    %1505 = vmatpush1.msra.mxu0 %v50
    %1506 = vmatprep.subr.mxu0 0.0
    %1507 = vmatpush1.msra.mxu0 %v49
    %1508 = vmatprep.subr.mxu0 0.0
    %1509 = vmatpush1.msra.mxu0 %v48
    %1510 = vmatprep.subr.mxu0 0.0
    %1511 = vmatpush1.msra.mxu0 %v47
    %1512 = vmatprep.subr.mxu0 0.0
    %1513 = vmatpush1.msra.mxu0 %v46
    %1514 = vmatprep.subr.mxu0 0.0
    %1515 = vmatpush1.msra.mxu0 %v45
    %1516 = vmatprep.subr.mxu0 0.0
    %1517 = vmatpush2.msra.mxu0 0.0
    %1518 = vmatprep.subr.mxu0 0.0
    %1519 = vmatpush2.msra.mxu0 0.0
    %1520 = vmatprep.subr.mxu0 0.0
    %1521 = vmatpush2.msra.mxu0 0.0
    %1522 = vmatprep.subr.mxu0 0.0
    %1523 = vmatpush2.msra.mxu0 0.0
    %1524 = vmatprep.subr.mxu0 0.0
    %1525 = vmatpush2.msra.mxu0 0.0
    %1526 = vmatprep.subr.mxu0 0.0
    %1527 = vmatpush2.msra.mxu0 0.0
    %1528 = vmatprep.subr.mxu0 0.0
    %1529 = vmatpush2.msra.mxu0 0.0
    %1530 = vmatprep.subr.mxu0 0.0
    %1531 = vmatpush2.msra.mxu0 0.0
    %1532 = vmatprep.subr.mxu0 0.0
    %1533 = vmatpush2.msra.mxu0 0.0
    %1534 = vmatprep.subr.mxu0 0.0
    %1535 = vmatpush2.msra.mxu0 0.0
    %1536 = vmatprep.subr.mxu0 0.0
    %1537 = vmatpush2.msra.mxu0 0.0
    %1538 = vmatprep.subr.mxu0 0.0
    %1539 = vmatpush2.msra.mxu0 0.0
    %1540 = vmatprep.subr.mxu0 0.0
    %1541 = vmatpush2.msra.mxu0 0.0
    %1542 = vmatprep.subr.mxu0 0.0
    %1543 = vmatpush2.msra.mxu0 0.0
    %1544 = vmatprep.subr.mxu0 0.0
    %1545 = vmatpush2.msra.mxu0 0.0
    %1546 = vmatprep.subr.mxu0 0.0
    %1547 = vmatpush2.msra.mxu0 0.0
    %1548 = vmatprep.mubr.f32.mxu0 0.0
    %1549 = vmatmul.mubr.f32.gmra.mxu0 %v1483
    %v1550 = vpop.f32.mrf.mxu0
    %v1551 = vadd.f32 0.0, %v1550
    %v1552 = vpop.f32.mrf.mxu0
    %1553 = vdwg.mxu0
    %v1554 = vadd.f32 %v608, %v1551
    %v1555 = vtanh.pop %v1554
    %v1556 = vxor.u32 %v1554, 2147483648
    %v1557 = vmul.f32 %v1556, 1.442695
    %v1558 = vpow.pop %v1557
    %v1559 = vadd.f32 %v1558, 1.0
    %v1560 = vrcp.pop %v1559
    %v1561 = vmul.f32 1.0, %v1560
    %v1562 = vsel %vm86, %v1555, %v1561
    %1563 = vrot.lane.b32.xlu0 %v1562, 96
    %v1564 = vpop.permute.xlu0 %1563
    %1565 = vrot.lane.b32.xlu0 %v1562, 64
    %v1566 = vpop.permute.xlu0 %1565
    %1567 = vrot.lane.b32.xlu0 %v1562, 32
    %v1568 = vpop.permute.xlu0 %1567
    %v1569 = vmul.f32 %v1564, %v1481
    %v1570 = vmul.f32 %v1562, %v1566
    %v1571 = vadd.f32 %v1569, %v1570
    %v1572 = vtanh.pop %v1571
    %v1573 = vmul.f32 %v1568, %v1572
    %1574 = vmatprep.subr.mxu0 0.0
    %1575 = vmatpush1.msra.mxu0 %v60
    %1576 = vmatprep.subr.mxu0 0.0
    %1577 = vmatpush1.msra.mxu0 %v59
    %1578 = vmatprep.subr.mxu0 0.0
    %1579 = vmatpush1.msra.mxu0 %v58
    %1580 = vmatprep.subr.mxu0 0.0
    %1581 = vmatpush1.msra.mxu0 %v57
    %1582 = vmatprep.subr.mxu0 0.0
    %1583 = vmatpush1.msra.mxu0 %v56
    %1584 = vmatprep.subr.mxu0 0.0
    %1585 = vmatpush1.msra.mxu0 %v55
    %1586 = vmatprep.subr.mxu0 0.0
    %1587 = vmatpush1.msra.mxu0 %v54
    %1588 = vmatprep.subr.mxu0 0.0
    %1589 = vmatpush1.msra.mxu0 %v53
    %1590 = vmatprep.subr.mxu0 0.0
    %1591 = vmatpush1.msra.mxu0 %v52
    %1592 = vmatprep.subr.mxu0 0.0
    %1593 = vmatpush1.msra.mxu0 %v51
    %1594 = vmatprep.subr.mxu0 0.0
    %1595 = vmatpush1.msra.mxu0 %v50
    %1596 = vmatprep.subr.mxu0 0.0
    %1597 = vmatpush1.msra.mxu0 %v49
    %1598 = vmatprep.subr.mxu0 0.0
    %1599 = vmatpush1.msra.mxu0 %v48
    %1600 = vmatprep.subr.mxu0 0.0
    %1601 = vmatpush1.msra.mxu0 %v47
    %1602 = vmatprep.subr.mxu0 0.0
    %1603 = vmatpush1.msra.mxu0 %v46
    %1604 = vmatprep.subr.mxu0 0.0
    %1605 = vmatpush1.msra.mxu0 %v45
    %1606 = vmatprep.subr.mxu0 0.0
    %1607 = vmatpush2.msra.mxu0 0.0
    %1608 = vmatprep.subr.mxu0 0.0
    %1609 = vmatpush2.msra.mxu0 0.0
    %1610 = vmatprep.subr.mxu0 0.0
    %1611 = vmatpush2.msra.mxu0 0.0
    %1612 = vmatprep.subr.mxu0 0.0
    %1613 = vmatpush2.msra.mxu0 0.0
    %1614 = vmatprep.subr.mxu0 0.0
    %1615 = vmatpush2.msra.mxu0 0.0
    %1616 = vmatprep.subr.mxu0 0.0
    %1617 = vmatpush2.msra.mxu0 0.0
    %1618 = vmatprep.subr.mxu0 0.0
    %1619 = vmatpush2.msra.mxu0 0.0
    %1620 = vmatprep.subr.mxu0 0.0
    %1621 = vmatpush2.msra.mxu0 0.0
    %1622 = vmatprep.subr.mxu0 0.0
    %1623 = vmatpush2.msra.mxu0 0.0
    %1624 = vmatprep.subr.mxu0 0.0
    %1625 = vmatpush2.msra.mxu0 0.0
    %1626 = vmatprep.subr.mxu0 0.0
    %1627 = vmatpush2.msra.mxu0 0.0
    %1628 = vmatprep.subr.mxu0 0.0
    %1629 = vmatpush2.msra.mxu0 0.0
    %1630 = vmatprep.subr.mxu0 0.0
    %1631 = vmatpush2.msra.mxu0 0.0
    %1632 = vmatprep.subr.mxu0 0.0
    %1633 = vmatpush2.msra.mxu0 0.0
    %1634 = vmatprep.subr.mxu0 0.0
    %1635 = vmatpush2.msra.mxu0 0.0
    %1636 = vmatprep.subr.mxu0 0.0
    %1637 = vmatpush2.msra.mxu0 0.0
    %1638 = vmatprep.mubr.f32.mxu0 0.0
    %1639 = vmatmul.mubr.f32.gmra.mxu0 %v1573
    %v1640 = vpop.f32.mrf.mxu0
    %v1641 = vadd.f32 0.0, %v1640
    %v1642 = vpop.f32.mrf.mxu0
    %1643 = vdwg.mxu0
    %v1644 = vadd.f32 %v609, %v1641
    %v1645 = vtanh.pop %v1644
    %v1646 = vxor.u32 %v1644, 2147483648
    %v1647 = vmul.f32 %v1646, 1.442695
    %v1648 = vpow.pop %v1647
    %v1649 = vadd.f32 %v1648, 1.0
    %v1650 = vrcp.pop %v1649
    %v1651 = vmul.f32 1.0, %v1650
    %v1652 = vsel %vm86, %v1645, %v1651
    %1653 = vrot.lane.b32.xlu0 %v1652, 96
    %v1654 = vpop.permute.xlu0 %1653
    %1655 = vrot.lane.b32.xlu0 %v1652, 64
    %v1656 = vpop.permute.xlu0 %1655
    %1657 = vrot.lane.b32.xlu0 %v1652, 32
    %v1658 = vpop.permute.xlu0 %1657
    %v1659 = vmul.f32 %v1654, %v1571
    %v1660 = vmul.f32 %v1652, %v1656
    %v1661 = vadd.f32 %v1659, %v1660
    %v1662 = vtanh.pop %v1661
    %v1663 = vmul.f32 %v1658, %v1662
    %1664 = vmatprep.subr.mxu0 0.0
    %1665 = vmatpush1.msra.mxu0 %v60
    %1666 = vmatprep.subr.mxu0 0.0
    %1667 = vmatpush1.msra.mxu0 %v59
    %1668 = vmatprep.subr.mxu0 0.0
    %1669 = vmatpush1.msra.mxu0 %v58
    %1670 = vmatprep.subr.mxu0 0.0
    %1671 = vmatpush1.msra.mxu0 %v57
    %1672 = vmatprep.subr.mxu0 0.0
    %1673 = vmatpush1.msra.mxu0 %v56
    %1674 = vmatprep.subr.mxu0 0.0
    %1675 = vmatpush1.msra.mxu0 %v55
    %1676 = vmatprep.subr.mxu0 0.0
    %1677 = vmatpush1.msra.mxu0 %v54
    %1678 = vmatprep.subr.mxu0 0.0
    %1679 = vmatpush1.msra.mxu0 %v53
    %1680 = vmatprep.subr.mxu0 0.0
    %1681 = vmatpush1.msra.mxu0 %v52
    %1682 = vmatprep.subr.mxu0 0.0
    %1683 = vmatpush1.msra.mxu0 %v51
    %1684 = vmatprep.subr.mxu0 0.0
    %1685 = vmatpush1.msra.mxu0 %v50
    %1686 = vmatprep.subr.mxu0 0.0
    %1687 = vmatpush1.msra.mxu0 %v49
    %1688 = vmatprep.subr.mxu0 0.0
    %1689 = vmatpush1.msra.mxu0 %v48
    %1690 = vmatprep.subr.mxu0 0.0
    %1691 = vmatpush1.msra.mxu0 %v47
    %1692 = vmatprep.subr.mxu0 0.0
    %1693 = vmatpush1.msra.mxu0 %v46
    %1694 = vmatprep.subr.mxu0 0.0
    %1695 = vmatpush1.msra.mxu0 %v45
    %1696 = vmatprep.subr.mxu0 0.0
    %1697 = vmatpush2.msra.mxu0 0.0
    %1698 = vmatprep.subr.mxu0 0.0
    %1699 = vmatpush2.msra.mxu0 0.0
    %1700 = vmatprep.subr.mxu0 0.0
    %1701 = vmatpush2.msra.mxu0 0.0
    %1702 = vmatprep.subr.mxu0 0.0
    %1703 = vmatpush2.msra.mxu0 0.0
    %1704 = vmatprep.subr.mxu0 0.0
    %1705 = vmatpush2.msra.mxu0 0.0
    %1706 = vmatprep.subr.mxu0 0.0
    %1707 = vmatpush2.msra.mxu0 0.0
    %1708 = vmatprep.subr.mxu0 0.0
    %1709 = vmatpush2.msra.mxu0 0.0
    %1710 = vmatprep.subr.mxu0 0.0
    %1711 = vmatpush2.msra.mxu0 0.0
    %1712 = vmatprep.subr.mxu0 0.0
    %1713 = vmatpush2.msra.mxu0 0.0
    %1714 = vmatprep.subr.mxu0 0.0
    %1715 = vmatpush2.msra.mxu0 0.0
    %1716 = vmatprep.subr.mxu0 0.0
    %1717 = vmatpush2.msra.mxu0 0.0
    %1718 = vmatprep.subr.mxu0 0.0
    %1719 = vmatpush2.msra.mxu0 0.0
    %1720 = vmatprep.subr.mxu0 0.0
    %1721 = vmatpush2.msra.mxu0 0.0
    %1722 = vmatprep.subr.mxu0 0.0
    %1723 = vmatpush2.msra.mxu0 0.0
    %1724 = vmatprep.subr.mxu0 0.0
    %1725 = vmatpush2.msra.mxu0 0.0
    %1726 = vmatprep.subr.mxu0 0.0
    %1727 = vmatpush2.msra.mxu0 0.0
    %1728 = vmatprep.mubr.f32.mxu0 0.0
    %1729 = vmatmul.mubr.f32.gmra.mxu0 %v1663
    %v1730 = vpop.f32.mrf.mxu0
    %v1731 = vadd.f32 0.0, %v1730
    %v1732 = vpop.f32.mrf.mxu0
    %1733 = vdwg.mxu0
    %v1734 = vadd.f32 %v610, %v1731
    %v1735 = vtanh.pop %v1734
    %v1736 = vxor.u32 %v1734, 2147483648
    %v1737 = vmul.f32 %v1736, 1.442695
    %v1738 = vpow.pop %v1737
    %v1739 = vadd.f32 %v1738, 1.0
    %v1740 = vrcp.pop %v1739
    %v1741 = vmul.f32 1.0, %v1740
    %v1742 = vsel %vm86, %v1735, %v1741
    %1743 = vrot.lane.b32.xlu0 %v1742, 96
    %v1744 = vpop.permute.xlu0 %1743
    %1745 = vrot.lane.b32.xlu0 %v1742, 64
    %v1746 = vpop.permute.xlu0 %1745
    %1747 = vrot.lane.b32.xlu0 %v1742, 32
    %v1748 = vpop.permute.xlu0 %1747
    %v1749 = vmul.f32 %v1744, %v1661
    %v1750 = vmul.f32 %v1742, %v1746
    %v1751 = vadd.f32 %v1749, %v1750
    %v1752 = vtanh.pop %v1751
    %v1753 = vmul.f32 %v1748, %v1752
    %1754 = vmatprep.subr.mxu0 0.0
    %1755 = vmatpush1.msra.mxu0 %v60
    %1756 = vmatprep.subr.mxu0 0.0
    %1757 = vmatpush1.msra.mxu0 %v59
    %1758 = vmatprep.subr.mxu0 0.0
    %1759 = vmatpush1.msra.mxu0 %v58
    %1760 = vmatprep.subr.mxu0 0.0
    %1761 = vmatpush1.msra.mxu0 %v57
    %1762 = vmatprep.subr.mxu0 0.0
    %1763 = vmatpush1.msra.mxu0 %v56
    %1764 = vmatprep.subr.mxu0 0.0
    %1765 = vmatpush1.msra.mxu0 %v55
    %1766 = vmatprep.subr.mxu0 0.0
    %1767 = vmatpush1.msra.mxu0 %v54
    %1768 = vmatprep.subr.mxu0 0.0
    %1769 = vmatpush1.msra.mxu0 %v53
    %1770 = vmatprep.subr.mxu0 0.0
    %1771 = vmatpush1.msra.mxu0 %v52
    %1772 = vmatprep.subr.mxu0 0.0
    %1773 = vmatpush1.msra.mxu0 %v51
    %1774 = vmatprep.subr.mxu0 0.0
    %1775 = vmatpush1.msra.mxu0 %v50
    %1776 = vmatprep.subr.mxu0 0.0
    %1777 = vmatpush1.msra.mxu0 %v49
    %1778 = vmatprep.subr.mxu0 0.0
    %1779 = vmatpush1.msra.mxu0 %v48
    %1780 = vmatprep.subr.mxu0 0.0
    %1781 = vmatpush1.msra.mxu0 %v47
    %1782 = vmatprep.subr.mxu0 0.0
    %1783 = vmatpush1.msra.mxu0 %v46
    %1784 = vmatprep.subr.mxu0 0.0
    %1785 = vmatpush1.msra.mxu0 %v45
    %1786 = vmatprep.subr.mxu0 0.0
    %1787 = vmatpush2.msra.mxu0 0.0
    %1788 = vmatprep.subr.mxu0 0.0
    %1789 = vmatpush2.msra.mxu0 0.0
    %1790 = vmatprep.subr.mxu0 0.0
    %1791 = vmatpush2.msra.mxu0 0.0
    %1792 = vmatprep.subr.mxu0 0.0
    %1793 = vmatpush2.msra.mxu0 0.0
    %1794 = vmatprep.subr.mxu0 0.0
    %1795 = vmatpush2.msra.mxu0 0.0
    %1796 = vmatprep.subr.mxu0 0.0
    %1797 = vmatpush2.msra.mxu0 0.0
    %1798 = vmatprep.subr.mxu0 0.0
    %1799 = vmatpush2.msra.mxu0 0.0
    %1800 = vmatprep.subr.mxu0 0.0
    %1801 = vmatpush2.msra.mxu0 0.0
    %1802 = vmatprep.subr.mxu0 0.0
    %1803 = vmatpush2.msra.mxu0 0.0
    %1804 = vmatprep.subr.mxu0 0.0
    %1805 = vmatpush2.msra.mxu0 0.0
    %1806 = vmatprep.subr.mxu0 0.0
    %1807 = vmatpush2.msra.mxu0 0.0
    %1808 = vmatprep.subr.mxu0 0.0
    %1809 = vmatpush2.msra.mxu0 0.0
    %1810 = vmatprep.subr.mxu0 0.0
    %1811 = vmatpush2.msra.mxu0 0.0
    %1812 = vmatprep.subr.mxu0 0.0
    %1813 = vmatpush2.msra.mxu0 0.0
    %1814 = vmatprep.subr.mxu0 0.0
    %1815 = vmatpush2.msra.mxu0 0.0
    %1816 = vmatprep.subr.mxu0 0.0
    %1817 = vmatpush2.msra.mxu0 0.0
    %1818 = vmatprep.mubr.f32.mxu0 0.0
    %1819 = vmatmul.mubr.f32.gmra.mxu0 %v1753
    %v1820 = vpop.f32.mrf.mxu0
    %v1821 = vadd.f32 0.0, %v1820
    %v1822 = vpop.f32.mrf.mxu0
    %1823 = vdwg.mxu0
    %v1824 = vadd.f32 %v611, %v1821
    %v1825 = vtanh.pop %v1824
    %v1826 = vxor.u32 %v1824, 2147483648
    %v1827 = vmul.f32 %v1826, 1.442695
    %v1828 = vpow.pop %v1827
    %v1829 = vadd.f32 %v1828, 1.0
    %v1830 = vrcp.pop %v1829
    %v1831 = vmul.f32 1.0, %v1830
    %v1832 = vsel %vm86, %v1825, %v1831
    %1833 = vrot.lane.b32.xlu0 %v1832, 96
    %v1834 = vpop.permute.xlu0 %1833
    %1835 = vrot.lane.b32.xlu0 %v1832, 64
    %v1836 = vpop.permute.xlu0 %1835
    %1837 = vrot.lane.b32.xlu0 %v1832, 32
    %v1838 = vpop.permute.xlu0 %1837
    %v1839 = vmul.f32 %v1834, %v1751
    %v1840 = vmul.f32 %v1832, %v1836
    %v1841 = vadd.f32 %v1839, %v1840
    %v1842 = vtanh.pop %v1841
    %v1843 = vmul.f32 %v1838, %v1842
  $region46: #{combined_model_forward.1} parent=0 // loop_footer
    %s601 = sadd.s32 1, %s597
  $region47: #{combined_model_forward.1} parent=0 // loop_footer_branch
    %596 = sbr.rel target = $region43
  $region48: #{combined_model_forward.1} parent=0 // loop_exit
    _
  %v1844 = vld [vmem:[%s8] sm:$0xff]
  %v1845 = vld [vmem:[%s8 + $0x8] sm:$0xff]
  %v1846 = vld [vmem:[%s8 + $0x10] sm:$0xff]
  %v1847 = vld [vmem:[%s8 + $0x18] sm:$0xff]
  %v1848 = vld [vmem:[%s8 + $0x20] sm:$0xff]
  %v1849 = vld [vmem:[%s8 + $0x28] sm:$0xff]
  %v1850 = vld [vmem:[%s8 + $0x30] sm:$0xff]
  %v1851 = vld [vmem:[%s8 + $0x38] sm:$0xff]
  %v1852 = vld [vmem:[%s8 + $0x40] sm:$0xff]
  %v1853 = vld [vmem:[%s8 + $0x48] sm:$0xff]
  %v1854 = vld [vmem:[%s8 + $0x50] sm:$0xff]
  %v1855 = vld [vmem:[%s8 + $0x58] sm:$0xff]
  %v1856 = vld [vmem:[%s8 + $0x60] sm:$0xff]
  %v1857 = vld [vmem:[%s8 + $0x68] sm:$0xff]
  %v1858 = vld [vmem:[%s8 + $0x70] sm:$0xff]
  %v1859 = vld [vmem:[%s8 + $0x78] sm:$0xff]
  %v1860 = vld [vmem:[%s9] sm:$0x1]
  %v1862 = vlaneseq
  %v1863 = vshrl.u32 %v1862, 7
  %v1864 = vsub.s32 0, %v1863
  %v1865 = vrot.slane %v1860, %v1864
  %1867 = vmatprep.subr.mxu0 0.0
  %1868 = vmatpush1.msra.mxu0 %v1859
  %1869 = vmatprep.subr.mxu0 0.0
  %1870 = vmatpush1.msra.mxu0 %v1858
  %1871 = vmatprep.subr.mxu0 0.0
  %1872 = vmatpush1.msra.mxu0 %v1857
  %1873 = vmatprep.subr.mxu0 0.0
  %1874 = vmatpush1.msra.mxu0 %v1856
  %1875 = vmatprep.subr.mxu0 0.0
  %1876 = vmatpush1.msra.mxu0 %v1855
  %1877 = vmatprep.subr.mxu0 0.0
  %1878 = vmatpush1.msra.mxu0 %v1854
  %1879 = vmatprep.subr.mxu0 0.0
  %1880 = vmatpush1.msra.mxu0 %v1853
  %1881 = vmatprep.subr.mxu0 0.0
  %1882 = vmatpush1.msra.mxu0 %v1852
  %1883 = vmatprep.subr.mxu0 0.0
  %1884 = vmatpush1.msra.mxu0 %v1851
  %1885 = vmatprep.subr.mxu0 0.0
  %1886 = vmatpush1.msra.mxu0 %v1850
  %1887 = vmatprep.subr.mxu0 0.0
  %1888 = vmatpush1.msra.mxu0 %v1849
  %1889 = vmatprep.subr.mxu0 0.0
  %1890 = vmatpush1.msra.mxu0 %v1848
  %1891 = vmatprep.subr.mxu0 0.0
  %1892 = vmatpush1.msra.mxu0 %v1847
  %1893 = vmatprep.subr.mxu0 0.0
  %1894 = vmatpush1.msra.mxu0 %v1846
  %1895 = vmatprep.subr.mxu0 0.0
  %1896 = vmatpush1.msra.mxu0 %v1845
  %1897 = vmatprep.subr.mxu0 0.0
  %1898 = vmatpush1.msra.mxu0 %v1844
  %1899 = vmatprep.subr.mxu0 0.0
  %1900 = vmatpush2.msra.mxu0 0.0
  %1901 = vmatprep.subr.mxu0 0.0
  %1902 = vmatpush2.msra.mxu0 0.0
  %1903 = vmatprep.subr.mxu0 0.0
  %1904 = vmatpush2.msra.mxu0 0.0
  %1905 = vmatprep.subr.mxu0 0.0
  %1906 = vmatpush2.msra.mxu0 0.0
  %1907 = vmatprep.subr.mxu0 0.0
  %1908 = vmatpush2.msra.mxu0 0.0
  %1909 = vmatprep.subr.mxu0 0.0
  %1910 = vmatpush2.msra.mxu0 0.0
  %1911 = vmatprep.subr.mxu0 0.0
  %1912 = vmatpush2.msra.mxu0 0.0
  %1913 = vmatprep.subr.mxu0 0.0
  %1914 = vmatpush2.msra.mxu0 0.0
  %1915 = vmatprep.subr.mxu0 0.0
  %1916 = vmatpush2.msra.mxu0 0.0
  %1917 = vmatprep.subr.mxu0 0.0
  %1918 = vmatpush2.msra.mxu0 0.0
  %1919 = vmatprep.subr.mxu0 0.0
  %1920 = vmatpush2.msra.mxu0 0.0
  %1921 = vmatprep.subr.mxu0 0.0
  %1922 = vmatpush2.msra.mxu0 0.0
  %1923 = vmatprep.subr.mxu0 0.0
  %1924 = vmatpush2.msra.mxu0 0.0
  %1925 = vmatprep.subr.mxu0 0.0
  %1926 = vmatpush2.msra.mxu0 0.0
  %1927 = vmatprep.subr.mxu0 0.0
  %1928 = vmatpush2.msra.mxu0 0.0
  %1929 = vmatprep.subr.mxu0 0.0
  %1930 = vmatpush2.msra.mxu0 0.0
  %1931 = vmatprep.mubr.f32.mxu0 0.0
  %1932 = vmatmul.mubr.f32.gmra.mxu0 %v602
  %v1933 = vpop.f32.mrf.mxu0
  %v1934 = vadd.f32 %v1865, %v1933
  %v1935 = vpop.f32.mrf.mxu0
  %1936 = vdwg.mxu0
  %vm1937 = vcmask 15360
  %1938 = vst.msk [vmem:[%s10] sm:$0xff] %vm1937, %v1934
  // Predicated region
  $region49: #{combined_model_forward.1} parent=0 // pred_check
    _
  $region50: #{combined_model_forward.1} parent=0 // pred_check_branch
    %1940 = sbr.rel (0) target = $region52
  $region51: #{combined_model_forward.1} parent=0 // pred_region
    _
  $region52: #{combined_model_forward.1} parent=0 // pred_fallthru
    _
  // Predicated region
  $region53: #{combined_model_forward.1} parent=0 // pred_check
    _
  $region54: #{combined_model_forward.1} parent=0 // pred_check_branch
    %1942 = sbr.rel (0) target = $region56
  $region55: #{combined_model_forward.1} parent=0 // pred_region
    _
  $region56: #{combined_model_forward.1} parent=0 // pred_fallthru
    _

</llo_original>
